<compile_context>
chip_gen: v5e
topology: v5e:2x2
jax: 0.10.0
libtpu: 0.0.40
codegen_flags: <defaults>
</compile_context>

<pallas_src>
import functools

import numpy as np
import jax
import jax.numpy as jnp
from jax.experimental import pallas as pl
from jax.experimental.pallas import tpu as pltpu

EPS = 1e-5  # nn.LayerNorm default eps
MASK_VALUE = -10000000.0


def _layer_norm(x, gamma, beta):
    mean = jnp.mean(x, axis=-1, keepdims=True)
    var = jnp.mean((x - mean) ** 2, axis=-1, keepdims=True)
    return (x - mean) * jax.lax.rsqrt(var + EPS) * gamma + beta


# ----------------------------------------------------------------------------
# Fused kernel: one batch element per grid step.
#   xp  = x + pos
#   x1  = PointwiseConv(relu(DepthwiseConv(LN(xp)))) + xp
#   x2  = (MHA(LN(x1), mask) + x1) * keep
#   out = (FFN(LN(x2)) + x2) * keep
# ----------------------------------------------------------------------------
def encoder_block_kernel(x_ref, keep_q_ref, keep_k_ref, pos_ref,
                         g_ref, b_ref,
                         dww_ref, dwb_ref, pww_ref, pwb_ref,
                         wqkv_ref, bqkv_ref, fcw_ref, fcb_ref,
                         w1_ref, b1_ref, w2_ref, b2_ref,
                         out_ref,
                         pad_ref, heads_ref,
                         *, kernel_size, nhead, dk, dv):
    slen, E = pos_ref.shape
    pad = kernel_size // 2

    gamma = g_ref[...]
    beta = b_ref[...]
    keep_q = keep_q_ref[0]            # [slen, 1]   1 = keep, 0 = pad
    keep_k = keep_k_ref[0]            # [1, slen]

    # ---------------- sublayer 1: conv (pre-LN residual) ----------------
    xp = x_ref[0] + pos_ref[...]                       # inputs + pos_embeds
    n1 = _layer_norm(xp, gamma, beta)

    # depthwise conv along seq with zero padding.  Only the 2*pad border rows
    # of the scratch are re-zeroed each step; the middle rows are overwritten.
    pad_ref[pl.ds(0, pad), :] = jnp.zeros((pad, E), jnp.float32)
    pad_ref[pl.ds(pad + slen, pad), :] = jnp.zeros((pad, E), jnp.float32)
    pad_ref[pl.ds(pad, slen), :] = n1
    acc = jnp.zeros((slen, E), jnp.float32)
    for j in range(kernel_size):                       # static unroll (K=7)
        acc = acc + pad_ref[pl.ds(j, slen), :] * dww_ref[pl.ds(j, 1), :]
    depth = jnp.maximum(acc + dwb_ref[...], 0.0)       # ReLU (VPU, f32)

    # pointwise 1x1 conv == channel matmul (bf16 operands, f32 accumulation)
    point = jnp.dot(depth.astype(jnp.bfloat16), pww_ref[...],
                    preferred_element_type=jnp.float32) + pwb_ref[...]
    x1 = point + xp                                    # residual (dropout == id)

    # ---------------- sublayer 2: multi-head attention ----------------
    n2 = _layer_norm(x1, gamma, beta)

    # fused Q/K/V projection: one matmul with contraction over E
    qkv = jnp.dot(n2.astype(jnp.bfloat16), wqkv_ref[...],
                  preferred_element_type=jnp.float32) + bqkv_ref[...]
    hk = nhead * dk
    q = qkv[:, :hk]
    k = qkv[:, hk:2 * hk]
    v = qkv[:, 2 * hk:2 * hk + nhead * dv]

    # attention mask rebuilt in-kernel from the keep vectors (no O(slen^2) DMA)
    keep_mat = keep_q * keep_k                         # [slen, slen], 1 = keep
    neg = (1.0 - keep_mat) * MASK_VALUE
    scale = 1.0 / np.sqrt(dk)

    for h in range(nhead):                             # static unroll (8 heads)
        qh = q[:, h * dk:(h + 1) * dk].astype(jnp.bfloat16)
        kh = k[:, h * dk:(h + 1) * dk].astype(jnp.bfloat16)
        vh = v[:, h * dv:(h + 1) * dv].astype(jnp.bfloat16)
        score = jax.lax.dot_general(qh, kh, (((1,), (1,)), ((), ())),
                                    preferred_element_type=jnp.float32) * scale
        score = score * keep_mat + neg                 # mask_logits
        score = score - jnp.max(score, axis=-1, keepdims=True)
        e = jnp.exp(score)
        w = e * pl.reciprocal(jnp.sum(e, axis=-1, keepdims=True), approx=True)
        w = w * keep_mat                               # mask_logits(value=0)
        heads_ref[:, h * dv:(h + 1) * dv] = jnp.dot(
            w.astype(jnp.bfloat16), vh, preferred_element_type=jnp.float32)

    # single output projection over the concatenated heads (K = nhead*dv)
    attn_out = jnp.dot(heads_ref[...].astype(jnp.bfloat16), fcw_ref[...],
                       preferred_element_type=jnp.float32) + fcb_ref[...]
    x2 = (attn_out + x1) * keep_q                      # residual + inputs_keep

    # ---------------- sublayer 3: FFN ----------------
    n3 = _layer_norm(x2, gamma, beta)
    inner = jnp.maximum(
        jnp.dot(n3.astype(jnp.bfloat16), w1_ref[...],
                preferred_element_type=jnp.float32) + b1_ref[...], 0.0)
    ffn = jnp.dot(inner.astype(jnp.bfloat16), w2_ref[...],
                  preferred_element_type=jnp.float32) + b2_ref[...]
    out_ref[0] = (ffn + x2) * keep_q


# ----------------------------------------------------------------------------
# Wrapper / glue
# ----------------------------------------------------------------------------
def _shared(shape):
    n = len(shape)
    return pl.BlockSpec(shape, lambda i, _n=n: (0,) * _n)


def _batched(shape):
    n = len(shape)
    return pl.BlockSpec((1,) + shape, lambda i, _n=n: (i,) + (0,) * _n)


def encoder_block_pallas(x, inputs_mask, p):
    b, slen, E = x.shape
    K, nhead = p["kernel_size"], p["nhead"]
    dk = dv = E
    pad = K // 2
    x = x.astype(jnp.float32)

    pos = p["pos_table"][:slen]                                       # [slen, E]
    keep = (1.0 - inputs_mask).astype(jnp.float32)                    # [b, slen]
    keep_q = keep[..., None]                                          # [b, slen, 1]
    keep_k = keep[:, None, :]                                         # [b, 1, slen]

    # fold Q/K/V into one weight; matmul weights stored in bf16
    wqkv = jnp.concatenate([p["wq"], p["wk"], p["wv"]], axis=1).astype(jnp.bfloat16)
    bqkv = jnp.concatenate([p["bq"], p["bk"], p["bv"]], axis=1)
    pw_w = p["pw_w"].astype(jnp.bfloat16)
    fc_w = p["fc_w"].astype(jnp.bfloat16)
    w1 = p["w1"].astype(jnp.bfloat16)
    w2 = p["w2"].astype(jnp.bfloat16)

    kern = functools.partial(encoder_block_kernel,
                             kernel_size=K, nhead=nhead, dk=dk, dv=dv)

    return pl.pallas_call(
        kern,
        out_shape=jax.ShapeDtypeStruct((b, slen, E), jnp.float32),
        grid=(b,),
        in_specs=[
            _batched((slen, E)),                         # x
            _batched((slen, 1)),                         # keep (query side)
            _batched((1, slen)),                         # keep (key side)
            _shared((slen, E)),                          # pos table
            _shared((1, E)), _shared((1, E)),            # LN gamma / beta
            _shared((K, E)), _shared((1, E)),            # depthwise w / b
            _shared((E, E)), _shared((1, E)),            # pointwise w / b
            _shared((E, 3 * nhead * dk)),                # W_qkv
            _shared((1, 3 * nhead * dk)),                # b_qkv
            _shared((nhead * dv, E)), _shared((1, E)),   # fc w / b
            _shared((E, 4 * E)), _shared((1, 4 * E)),    # ffn w1 / b1
            _shared((4 * E, E)), _shared((1, E)),        # ffn w2 / b2
        ],
        out_specs=_batched((slen, E)),
        scratch_shapes=[
            pltpu.VMEM((slen + 2 * pad, E), jnp.float32),     # conv zero-pad buf
            pltpu.VMEM((slen, nhead * dv), jnp.float32),      # concatenated heads
        ],
        compiler_params=pltpu.CompilerParams(
            dimension_semantics=("parallel",),
            vmem_limit_bytes=32 * 1024 * 1024),
    )(x, keep_q, keep_k, pos, p["ln_g"], p["ln_b"],
      p["dw_w"], p["dw_b"], pw_w, p["pw_b"],
      wqkv, bqkv, fc_w, p["fc_b"],
      w1, p["b1"], w2, p["b2"])


# ----------------------------------------------------------------------------
# Deterministic parameter init (synthetic; same shapes as the nn.Module)
# ----------------------------------------------------------------------------
def positional_table(n_position, E):
    pos = np.arange(n_position, dtype=np.float64)[:, None]
    i = np.arange(E, dtype=np.float64)[None, :]
    mat = pos / np.power(10000.0, 2.0 * i / E)
    mat[:, 0::2] = np.sin(mat[:, 0::2])
    mat[:, 1::2] = np.cos(mat[:, 1::2])
    return jnp.asarray(mat, dtype=jnp.float32)


def init_params(key, E, K, nhead):
    keys = jax.random.split(key, 16)
    s = 0.05

    def rnd(k, shape):
        return jax.random.normal(k, shape, jnp.float32) * s

    return dict(
        kernel_size=K, nhead=nhead,
        pos_table=positional_table(400, E),
        # the single shared SublayerConnection -> one LayerNorm used 3 times
        ln_g=jnp.ones((1, E), jnp.float32),
        ln_b=jnp.zeros((1, E), jnp.float32),
        # DepthwiseSeparableConv: depthwise (K,E) taps + pointwise (E,E)
        dw_w=rnd(keys[0], (K, E)), dw_b=rnd(keys[1], (1, E)),
        pw_w=rnd(keys[2], (E, E)), pw_b=rnd(keys[3], (1, E)),
        # MultiHeadAttention (dk = dv = E, nhead heads)
        wq=rnd(keys[4], (E, nhead * E)), bq=rnd(keys[5], (1, nhead * E)),
        wk=rnd(keys[6], (E, nhead * E)), bk=rnd(keys[7], (1, nhead * E)),
        wv=rnd(keys[8], (E, nhead * E)), bv=rnd(keys[9], (1, nhead * E)),
        fc_w=rnd(keys[10], (nhead * E, E)), fc_b=rnd(keys[11], (1, E)),
        # PositioniseFeedForward (dinner = 4E)
        w1=rnd(keys[12], (E, 4 * E)), b1=rnd(keys[13], (1, 4 * E)),
        w2=rnd(keys[14], (4 * E, E)), b2=rnd(keys[15], (1, E)),
    )


# ----------------------------------------------------------------------------
# Pure-JAX f32 reference (same math) for verification
# ----------------------------------------------------------------------------
def _ln_ref(x, g, b):
    m = jnp.mean(x, -1, keepdims=True)
    v = jnp.mean((x - m) ** 2, -1, keepdims=True)
    return (x - m) / jnp.sqrt(v + EPS) * g + b


def encoder_block_ref(x, mask, p):
    b, slen, E = x.shape
    K, nhead = p["kernel_size"], p["nhead"]
    keep = (1.0 - mask)[..., None]
    amask = 1.0 - keep * jnp.swapaxes(keep, 1, 2)
    xp = x + p["pos_table"][:slen][None]
    # conv sublayer
    n = _ln_ref(xp, p["ln_g"], p["ln_b"])
    npad = jnp.pad(n, ((0, 0), (K // 2, K // 2), (0, 0)))
    acc = sum(npad[:, j:j + slen, :] * p["dw_w"][j] for j in range(K))
    depth = jax.nn.relu(acc + p["dw_b"])
    x1 = depth @ p["pw_w"] + p["pw_b"] + xp
    # attention sublayer
    n = _ln_ref(x1, p["ln_g"], p["ln_b"])
    q = n @ p["wq"] + p["bq"]
    k = n @ p["wk"] + p["bk"]
    v = n @ p["wv"] + p["bv"]
    heads = []
    for h in range(nhead):
        qh, kh, vh = (t[..., h * E:(h + 1) * E] for t in (q, k, v))
        score = jnp.einsum("bqd,bkd->bqk", qh, kh) / np.sqrt(E)
        score = score * (1 - amask) + amask * MASK_VALUE
        w = jax.nn.softmax(score, axis=-1) * (1 - amask)
        heads.append(jnp.einsum("bqk,bkd->bqd", w, vh))
    cat = jnp.concatenate(heads, axis=-1)
    x2 = (cat @ p["fc_w"] + p["fc_b"] + x1) * keep
    # ffn sublayer
    n = _ln_ref(x2, p["ln_g"], p["ln_b"])
    inner = jax.nn.relu(n @ p["w1"] + p["b1"])
    return (inner @ p["w2"] + p["b2"] + x2) * keep


if __name__ == "__main__":
    b, slen, E, K, nhead = 2, 8, 32, 7, 8
    key = jax.random.PRNGKey(0)
    kx, kp = jax.random.split(key)
    x = jax.random.normal(kx, (b, slen, E), jnp.float32)
    # pad is 1, non-pad is 0
    inputs_mask = jnp.array([[0, 0, 0, 0, 0, 0, 1, 1],
                             [0, 0, 0, 0, 1, 1, 1, 1]], jnp.float32)
    params = init_params(kp, E, K, nhead)

    out = encoder_block_pallas(x, inputs_mask, params)
    out = jax.block_until_ready(out)

    ref = encoder_block_ref(x, inputs_mask, params)
    # bf16 matmul operands (f32 accumulation) vs. pure-f32 reference
    np.testing.assert_allclose(np.asarray(out), np.asarray(ref),
                               atol=3e-2, rtol=3e-2)
    print("KERNEL_OK")
</pallas_src>

<mosaic_0001>
module attributes {stable_mosaic.version = 11 : i64} {
  func.func @encoder_block_kernel(%arg0: i32, %arg1: memref<1x8x32xf32, #tpu.memory_space<vmem>>, %arg2: memref<1x8x1xf32, #tpu.memory_space<vmem>>, %arg3: memref<1x1x8xf32, #tpu.memory_space<vmem>>, %arg4: memref<8x32xf32, #tpu.memory_space<vmem>>, %arg5: memref<1x32xf32, #tpu.memory_space<vmem>>, %arg6: memref<1x32xf32, #tpu.memory_space<vmem>>, %arg7: memref<7x32xf32, #tpu.memory_space<vmem>>, %arg8: memref<1x32xf32, #tpu.memory_space<vmem>>, %arg9: memref<32x32xbf16, #tpu.memory_space<vmem>>, %arg10: memref<1x32xf32, #tpu.memory_space<vmem>>, %arg11: memref<32x768xbf16, #tpu.memory_space<vmem>>, %arg12: memref<1x768xf32, #tpu.memory_space<vmem>>, %arg13: memref<256x32xbf16, #tpu.memory_space<vmem>>, %arg14: memref<1x32xf32, #tpu.memory_space<vmem>>, %arg15: memref<32x128xbf16, #tpu.memory_space<vmem>>, %arg16: memref<1x128xf32, #tpu.memory_space<vmem>>, %arg17: memref<128x32xbf16, #tpu.memory_space<vmem>>, %arg18: memref<1x32xf32, #tpu.memory_space<vmem>>, %arg19: memref<1x8x32xf32, #tpu.memory_space<vmem>>, %arg20: memref<14x32xf32, #tpu.memory_space<vmem>>, %arg21: memref<8x256xf32, #tpu.memory_space<vmem>>) attributes {dimension_semantics = [#tpu.dimension_semantics<parallel>], iteration_bounds = array<i64: 2>, scalar_prefetch = 0 : i64, scratch_operands = 2 : i64, tpu.core_type = #tpu.core_type<tc>, window_params = [{transform_indices = @transform_0, window_bounds = array<i64: 1, 8, 32>}, {transform_indices = @transform_1, window_bounds = array<i64: 1, 8, 1>}, {transform_indices = @transform_2, window_bounds = array<i64: 1, 1, 8>}, {pipeline_mode = #tpu.pipeline_mode<synchronous>, transform_indices = @transform_3, window_bounds = array<i64: 8, 32>}, {pipeline_mode = #tpu.pipeline_mode<synchronous>, transform_indices = @transform_4, window_bounds = array<i64: 1, 32>}, {pipeline_mode = #tpu.pipeline_mode<synchronous>, transform_indices = @transform_5, window_bounds = array<i64: 1, 32>}, {pipeline_mode = #tpu.pipeline_mode<synchronous>, transform_indices = @transform_6, window_bounds = array<i64: 7, 32>}, {pipeline_mode = #tpu.pipeline_mode<synchronous>, transform_indices = @transform_7, window_bounds = array<i64: 1, 32>}, {pipeline_mode = #tpu.pipeline_mode<synchronous>, transform_indices = @transform_8, window_bounds = array<i64: 32, 32>}, {pipeline_mode = #tpu.pipeline_mode<synchronous>, transform_indices = @transform_9, window_bounds = array<i64: 1, 32>}, {pipeline_mode = #tpu.pipeline_mode<synchronous>, transform_indices = @transform_10, window_bounds = array<i64: 32, 768>}, {pipeline_mode = #tpu.pipeline_mode<synchronous>, transform_indices = @transform_11, window_bounds = array<i64: 1, 768>}, {pipeline_mode = #tpu.pipeline_mode<synchronous>, transform_indices = @transform_12, window_bounds = array<i64: 256, 32>}, {pipeline_mode = #tpu.pipeline_mode<synchronous>, transform_indices = @transform_13, window_bounds = array<i64: 1, 32>}, {pipeline_mode = #tpu.pipeline_mode<synchronous>, transform_indices = @transform_14, window_bounds = array<i64: 32, 128>}, {pipeline_mode = #tpu.pipeline_mode<synchronous>, transform_indices = @transform_15, window_bounds = array<i64: 1, 128>}, {pipeline_mode = #tpu.pipeline_mode<synchronous>, transform_indices = @transform_16, window_bounds = array<i64: 128, 32>}, {pipeline_mode = #tpu.pipeline_mode<synchronous>, transform_indices = @transform_17, window_bounds = array<i64: 1, 32>}, {transform_indices = @transform_18, window_bounds = array<i64: 1, 8, 32>}]} {
    %c0 = arith.constant 0 : index
    %c0_0 = arith.constant 0 : index
    %0 = vector.load %arg5[%c0, %c0_0] : memref<1x32xf32, #tpu.memory_space<vmem>>, vector<1x32xf32>
    %c0_1 = arith.constant 0 : index
    %c0_2 = arith.constant 0 : index
    %1 = vector.load %arg6[%c0_1, %c0_2] : memref<1x32xf32, #tpu.memory_space<vmem>>, vector<1x32xf32>
    %c0_3 = arith.constant 0 : index
    %c0_4 = arith.constant 0 : index
    %c0_5 = arith.constant 0 : index
    %2 = vector.load %arg2[%c0_3, %c0_4, %c0_5] : memref<1x8x1xf32, #tpu.memory_space<vmem>>, vector<1x8x1xf32>
    %3 = vector.shape_cast %2 : vector<1x8x1xf32> to vector<8x1xf32>
    %c0_6 = arith.constant 0 : index
    %c0_7 = arith.constant 0 : index
    %c0_8 = arith.constant 0 : index
    %4 = vector.load %arg3[%c0_6, %c0_7, %c0_8] : memref<1x1x8xf32, #tpu.memory_space<vmem>>, vector<1x1x8xf32>
    %5 = vector.shape_cast %4 : vector<1x1x8xf32> to vector<1x8xf32>
    %c0_9 = arith.constant 0 : index
    %c0_10 = arith.constant 0 : index
    %c0_11 = arith.constant 0 : index
    %6 = vector.load %arg1[%c0_9, %c0_10, %c0_11] : memref<1x8x32xf32, #tpu.memory_space<vmem>>, vector<1x8x32xf32>
    %7 = vector.shape_cast %6 : vector<1x8x32xf32> to vector<8x32xf32>
    %c0_12 = arith.constant 0 : index
    %c0_13 = arith.constant 0 : index
    %8 = vector.load %arg4[%c0_12, %c0_13] : memref<8x32xf32, #tpu.memory_space<vmem>>, vector<8x32xf32>
    %9 = arith.addf %7, %8 : vector<8x32xf32>
    %cst = arith.constant dense<0.000000e+00> : vector<8xf32>
    %10 = vector.multi_reduction <add>, %9, %cst [1] : vector<8x32xf32> to vector<8xf32>
    %11 = vector.shape_cast %10 : vector<8xf32> to vector<8x1xf32>
    %cst_14 = arith.constant 3.200000e+01 : f32
    %12 = vector.broadcast %cst_14 : f32 to vector<8x1xf32>
    %13 = arith.divf %11, %12 : vector<8x1xf32>
    %14 = vector.broadcast %13 : vector<8x1xf32> to vector<8x32xf32>
    %15 = arith.subf %9, %14 : vector<8x32xf32>
    %16 = arith.mulf %15, %15 : vector<8x32xf32>
    %cst_15 = arith.constant dense<0.000000e+00> : vector<8xf32>
    %17 = vector.multi_reduction <add>, %16, %cst_15 [1] : vector<8x32xf32> to vector<8xf32>
    %18 = vector.shape_cast %17 : vector<8xf32> to vector<8x1xf32>
    %cst_16 = arith.constant 3.200000e+01 : f32
    %19 = vector.broadcast %cst_16 : f32 to vector<8x1xf32>
    %20 = arith.divf %18, %19 : vector<8x1xf32>
    %21 = vector.broadcast %13 : vector<8x1xf32> to vector<8x32xf32>
    %22 = arith.subf %9, %21 : vector<8x32xf32>
    %cst_17 = arith.constant 9.99999974E-6 : f32
    %23 = vector.broadcast %cst_17 : f32 to vector<8x1xf32>
    %24 = arith.addf %20, %23 : vector<8x1xf32>
    %25 = math.rsqrt %24 : vector<8x1xf32>
    %26 = vector.broadcast %25 : vector<8x1xf32> to vector<8x32xf32>
    %27 = arith.mulf %22, %26 : vector<8x32xf32>
    %28 = vector.broadcast %0 : vector<1x32xf32> to vector<8x32xf32>
    %29 = arith.mulf %27, %28 : vector<8x32xf32>
    %30 = vector.broadcast %1 : vector<1x32xf32> to vector<8x32xf32>
    %31 = arith.addf %29, %30 : vector<8x32xf32>
    %cst_18 = arith.constant 0.000000e+00 : f32
    %32 = vector.broadcast %cst_18 : f32 to vector<3x32xf32>
    %c0_19 = arith.constant 0 : index
    %c0_20 = arith.constant 0 : index
    %33 = vector.load %arg20[%c0_19, %c0_20] : memref<14x32xf32, #tpu.memory_space<vmem>>, vector<3x32xf32>
    tpu.vector_store %arg20[%c0_19, %c0_20], %32 {strides = array<i32>} : memref<14x32xf32, #tpu.memory_space<vmem>>, vector<3x32xf32>,
    %cst_21 = arith.constant 0.000000e+00 : f32
    %34 = vector.broadcast %cst_21 : f32 to vector<3x32xf32>
    %c11 = arith.constant 11 : index
    %c0_22 = arith.constant 0 : index
    %35 = vector.load %arg20[%c11, %c0_22] : memref<14x32xf32, #tpu.memory_space<vmem>>, vector<3x32xf32>
    tpu.vector_store %arg20[%c11, %c0_22], %34 {strides = array<i32>} : memref<14x32xf32, #tpu.memory_space<vmem>>, vector<3x32xf32>,
    %c3 = arith.constant 3 : index
    %c0_23 = arith.constant 0 : index
    %36 = vector.load %arg20[%c3, %c0_23] : memref<14x32xf32, #tpu.memory_space<vmem>>, vector<8x32xf32>
    tpu.vector_store %arg20[%c3, %c0_23], %31 {strides = array<i32>} : memref<14x32xf32, #tpu.memory_space<vmem>>, vector<8x32xf32>,
    %cst_24 = arith.constant 0.000000e+00 : f32
    %37 = vector.broadcast %cst_24 : f32 to vector<8x32xf32>
    %c0_25 = arith.constant 0 : index
    %c0_26 = arith.constant 0 : index
    %38 = vector.load %arg20[%c0_25, %c0_26] : memref<14x32xf32, #tpu.memory_space<vmem>>, vector<8x32xf32>
    %c0_27 = arith.constant 0 : index
    %c0_28 = arith.constant 0 : index
    %39 = vector.load %arg7[%c0_27, %c0_28] : memref<7x32xf32, #tpu.memory_space<vmem>>, vector<1x32xf32>
    %40 = vector.broadcast %39 : vector<1x32xf32> to vector<8x32xf32>
    %41 = arith.mulf %38, %40 : vector<8x32xf32>
    %42 = arith.addf %37, %41 : vector<8x32xf32>
    %c1 = arith.constant 1 : index
    %c0_29 = arith.constant 0 : index
    %43 = vector.load %arg20[%c1, %c0_29] : memref<14x32xf32, #tpu.memory_space<vmem>>, vector<8x32xf32>
    %c1_30 = arith.constant 1 : index
    %c0_31 = arith.constant 0 : index
    %44 = vector.load %arg7[%c1_30, %c0_31] : memref<7x32xf32, #tpu.memory_space<vmem>>, vector<1x32xf32>
    %45 = vector.broadcast %44 : vector<1x32xf32> to vector<8x32xf32>
    %46 = arith.mulf %43, %45 : vector<8x32xf32>
    %47 = arith.addf %42, %46 : vector<8x32xf32>
    %c2 = arith.constant 2 : index
    %c0_32 = arith.constant 0 : index
    %48 = vector.load %arg20[%c2, %c0_32] : memref<14x32xf32, #tpu.memory_space<vmem>>, vector<8x32xf32>
    %c2_33 = arith.constant 2 : index
    %c0_34 = arith.constant 0 : index
    %49 = vector.load %arg7[%c2_33, %c0_34] : memref<7x32xf32, #tpu.memory_space<vmem>>, vector<1x32xf32>
    %50 = vector.broadcast %49 : vector<1x32xf32> to vector<8x32xf32>
    %51 = arith.mulf %48, %50 : vector<8x32xf32>
    %52 = arith.addf %47, %51 : vector<8x32xf32>
    %c3_35 = arith.constant 3 : index
    %c0_36 = arith.constant 0 : index
    %53 = vector.load %arg20[%c3_35, %c0_36] : memref<14x32xf32, #tpu.memory_space<vmem>>, vector<8x32xf32>
    %c3_37 = arith.constant 3 : index
    %c0_38 = arith.constant 0 : index
    %54 = vector.load %arg7[%c3_37, %c0_38] : memref<7x32xf32, #tpu.memory_space<vmem>>, vector<1x32xf32>
    %55 = vector.broadcast %54 : vector<1x32xf32> to vector<8x32xf32>
    %56 = arith.mulf %53, %55 : vector<8x32xf32>
    %57 = arith.addf %52, %56 : vector<8x32xf32>
    %c4 = arith.constant 4 : index
    %c0_39 = arith.constant 0 : index
    %58 = vector.load %arg20[%c4, %c0_39] : memref<14x32xf32, #tpu.memory_space<vmem>>, vector<8x32xf32>
    %c4_40 = arith.constant 4 : index
    %c0_41 = arith.constant 0 : index
    %59 = vector.load %arg7[%c4_40, %c0_41] : memref<7x32xf32, #tpu.memory_space<vmem>>, vector<1x32xf32>
    %60 = vector.broadcast %59 : vector<1x32xf32> to vector<8x32xf32>
    %61 = arith.mulf %58, %60 : vector<8x32xf32>
    %62 = arith.addf %57, %61 : vector<8x32xf32>
    %c5 = arith.constant 5 : index
    %c0_42 = arith.constant 0 : index
    %63 = vector.load %arg20[%c5, %c0_42] : memref<14x32xf32, #tpu.memory_space<vmem>>, vector<8x32xf32>
    %c5_43 = arith.constant 5 : index
    %c0_44 = arith.constant 0 : index
    %64 = vector.load %arg7[%c5_43, %c0_44] : memref<7x32xf32, #tpu.memory_space<vmem>>, vector<1x32xf32>
    %65 = vector.broadcast %64 : vector<1x32xf32> to vector<8x32xf32>
    %66 = arith.mulf %63, %65 : vector<8x32xf32>
    %67 = arith.addf %62, %66 : vector<8x32xf32>
    %c6 = arith.constant 6 : index
    %c0_45 = arith.constant 0 : index
    %68 = vector.load %arg20[%c6, %c0_45] : memref<14x32xf32, #tpu.memory_space<vmem>>, vector<8x32xf32>
    %c6_46 = arith.constant 6 : index
    %c0_47 = arith.constant 0 : index
    %69 = vector.load %arg7[%c6_46, %c0_47] : memref<7x32xf32, #tpu.memory_space<vmem>>, vector<1x32xf32>
    %70 = vector.broadcast %69 : vector<1x32xf32> to vector<8x32xf32>
    %71 = arith.mulf %68, %70 : vector<8x32xf32>
    %72 = arith.addf %67, %71 : vector<8x32xf32>
    %c0_48 = arith.constant 0 : index
    %c0_49 = arith.constant 0 : index
    %73 = vector.load %arg8[%c0_48, %c0_49] : memref<1x32xf32, #tpu.memory_space<vmem>>, vector<1x32xf32>
    %74 = vector.broadcast %73 : vector<1x32xf32> to vector<8x32xf32>
    %75 = arith.addf %72, %74 : vector<8x32xf32>
    %cst_50 = arith.constant 0.000000e+00 : f32
    %76 = vector.broadcast %cst_50 : f32 to vector<8x32xf32>
    %77 = arith.maximumf %75, %76 : vector<8x32xf32>
    %78 = arith.truncf %77 : vector<8x32xf32> to vector<8x32xbf16>
    %c0_51 = arith.constant 0 : index
    %c0_52 = arith.constant 0 : index
    %79 = vector.load %arg9[%c0_51, %c0_52] : memref<32x32xbf16, #tpu.memory_space<vmem>>, vector<32x32xbf16>
    %cst_53 = arith.constant dense<0.000000e+00> : vector<8x32xf32>
    %80 = tpu.matmul %78, %79, %cst_53 {dimension_numbers = #tpu.dot_dimension_numbers<[1], [0], [0], [1], [0, 0, 1, 1], [], []>} : vector<8x32xbf16>, vector<32x32xbf16>, vector<8x32xf32> -> vector<8x32xf32>
    %c0_54 = arith.constant 0 : index
    %c0_55 = arith.constant 0 : index
    %81 = vector.load %arg10[%c0_54, %c0_55] : memref<1x32xf32, #tpu.memory_space<vmem>>, vector<1x32xf32>
    %82 = vector.broadcast %81 : vector<1x32xf32> to vector<8x32xf32>
    %83 = arith.addf %80, %82 : vector<8x32xf32>
    %84 = arith.addf %83, %9 : vector<8x32xf32>
    %cst_56 = arith.constant dense<0.000000e+00> : vector<8xf32>
    %85 = vector.multi_reduction <add>, %84, %cst_56 [1] : vector<8x32xf32> to vector<8xf32>
    %86 = vector.shape_cast %85 : vector<8xf32> to vector<8x1xf32>
    %cst_57 = arith.constant 3.200000e+01 : f32
    %87 = vector.broadcast %cst_57 : f32 to vector<8x1xf32>
    %88 = arith.divf %86, %87 : vector<8x1xf32>
    %89 = vector.broadcast %88 : vector<8x1xf32> to vector<8x32xf32>
    %90 = arith.subf %84, %89 : vector<8x32xf32>
    %91 = arith.mulf %90, %90 : vector<8x32xf32>
    %cst_58 = arith.constant dense<0.000000e+00> : vector<8xf32>
    %92 = vector.multi_reduction <add>, %91, %cst_58 [1] : vector<8x32xf32> to vector<8xf32>
    %93 = vector.shape_cast %92 : vector<8xf32> to vector<8x1xf32>
    %cst_59 = arith.constant 3.200000e+01 : f32
    %94 = vector.broadcast %cst_59 : f32 to vector<8x1xf32>
    %95 = arith.divf %93, %94 : vector<8x1xf32>
    %96 = vector.broadcast %88 : vector<8x1xf32> to vector<8x32xf32>
    %97 = arith.subf %84, %96 : vector<8x32xf32>
    %cst_60 = arith.constant 9.99999974E-6 : f32
    %98 = vector.broadcast %cst_60 : f32 to vector<8x1xf32>
    %99 = arith.addf %95, %98 : vector<8x1xf32>
    %100 = math.rsqrt %99 : vector<8x1xf32>
    %101 = vector.broadcast %100 : vector<8x1xf32> to vector<8x32xf32>
    %102 = arith.mulf %97, %101 : vector<8x32xf32>
    %103 = vector.broadcast %0 : vector<1x32xf32> to vector<8x32xf32>
    %104 = arith.mulf %102, %103 : vector<8x32xf32>
    %105 = vector.broadcast %1 : vector<1x32xf32> to vector<8x32xf32>
    %106 = arith.addf %104, %105 : vector<8x32xf32>
    %107 = arith.truncf %106 : vector<8x32xf32> to vector<8x32xbf16>
    %c0_61 = arith.constant 0 : index
    %c0_62 = arith.constant 0 : index
    %108 = vector.load %arg11[%c0_61, %c0_62] : memref<32x768xbf16, #tpu.memory_space<vmem>>, vector<32x768xbf16>
    %cst_63 = arith.constant dense<0.000000e+00> : vector<8x768xf32>
    %109 = tpu.matmul %107, %108, %cst_63 {dimension_numbers = #tpu.dot_dimension_numbers<[1], [0], [0], [1], [0, 0, 1, 1], [], []>} : vector<8x32xbf16>, vector<32x768xbf16>, vector<8x768xf32> -> vector<8x768xf32>
    %c0_64 = arith.constant 0 : index
    %c0_65 = arith.constant 0 : index
    %110 = vector.load %arg12[%c0_64, %c0_65] : memref<1x768xf32, #tpu.memory_space<vmem>>, vector<1x768xf32>
    %111 = vector.broadcast %110 : vector<1x768xf32> to vector<8x768xf32>
    %112 = arith.addf %109, %111 : vector<8x768xf32>
    %113 = vector.extract_strided_slice %112 {offsets = [0, 0], sizes = [8, 256], strides = [1, 1]} : vector<8x768xf32> to vector<8x256xf32>
    %114 = vector.extract_strided_slice %112 {offsets = [0, 256], sizes = [8, 256], strides = [1, 1]} : vector<8x768xf32> to vector<8x256xf32>
    %115 = vector.extract_strided_slice %112 {offsets = [0, 512], sizes = [8, 256], strides = [1, 1]} : vector<8x768xf32> to vector<8x256xf32>
    %116 = vector.broadcast %3 : vector<8x1xf32> to vector<8x8xf32>
    %117 = vector.broadcast %5 : vector<1x8xf32> to vector<8x8xf32>
    %118 = arith.mulf %116, %117 : vector<8x8xf32>
    %cst_66 = arith.constant 1.000000e+00 : f32
    %119 = vector.broadcast %cst_66 : f32 to vector<8x8xf32>
    %120 = arith.subf %119, %118 : vector<8x8xf32>
    %cst_67 = arith.constant -1.000000e+07 : f32
    %121 = vector.broadcast %cst_67 : f32 to vector<8x8xf32>
    %122 = arith.mulf %120, %121 : vector<8x8xf32>
    %123 = vector.extract_strided_slice %113 {offsets = [0, 0], sizes = [8, 32], strides = [1, 1]} : vector<8x256xf32> to vector<8x32xf32>
    %124 = arith.truncf %123 : vector<8x32xf32> to vector<8x32xbf16>
    %125 = vector.extract_strided_slice %114 {offsets = [0, 0], sizes = [8, 32], strides = [1, 1]} : vector<8x256xf32> to vector<8x32xf32>
    %126 = arith.truncf %125 : vector<8x32xf32> to vector<8x32xbf16>
    %127 = vector.extract_strided_slice %115 {offsets = [0, 0], sizes = [8, 32], strides = [1, 1]} : vector<8x256xf32> to vector<8x32xf32>
    %128 = arith.truncf %127 : vector<8x32xf32> to vector<8x32xbf16>
    %cst_68 = arith.constant dense<0.000000e+00> : vector<8x8xf32>
    %129 = tpu.matmul %124, %126, %cst_68 {dimension_numbers = #tpu.dot_dimension_numbers<[1], [1], [0], [0], [0, 0, 1, 0], [], []>} : vector<8x32xbf16>, vector<8x32xbf16>, vector<8x8xf32> -> vector<8x8xf32>
    %cst_69 = arith.constant 0.176776692 : f32
    %130 = vector.broadcast %cst_69 : f32 to vector<8x8xf32>
    %131 = arith.mulf %129, %130 : vector<8x8xf32>
    %132 = arith.mulf %131, %118 : vector<8x8xf32>
    %133 = arith.addf %132, %122 : vector<8x8xf32>
    %cst_70 = arith.constant dense<0xFF800000> : vector<8xf32>
    %134 = vector.multi_reduction <maximumf>, %133, %cst_70 [1] : vector<8x8xf32> to vector<8xf32>
    %135 = vector.shape_cast %134 : vector<8xf32> to vector<8x1xf32>
    %136 = vector.broadcast %135 : vector<8x1xf32> to vector<8x8xf32>
    %137 = arith.subf %133, %136 : vector<8x8xf32>
    %138 = math.exp %137 : vector<8x8xf32>
    %cst_71 = arith.constant dense<0.000000e+00> : vector<8xf32>
    %139 = vector.multi_reduction <add>, %138, %cst_71 [1] : vector<8x8xf32> to vector<8xf32>
    %140 = vector.shape_cast %139 : vector<8xf32> to vector<8x1xf32>
    %141 = tpu.reciprocal %140 {approx = true} : vector<8x1xf32> -> vector<8x1xf32>
    %142 = vector.broadcast %141 : vector<8x1xf32> to vector<8x8xf32>
    %143 = arith.mulf %138, %142 : vector<8x8xf32>
    %144 = arith.mulf %143, %118 : vector<8x8xf32>
    %145 = arith.truncf %144 : vector<8x8xf32> to vector<8x8xbf16>
    %cst_72 = arith.constant dense<0.000000e+00> : vector<8x32xf32>
    %146 = tpu.matmul %145, %128, %cst_72 {dimension_numbers = #tpu.dot_dimension_numbers<[1], [0], [0], [1], [0, 0, 1, 1], [], []>} : vector<8x8xbf16>, vector<8x32xbf16>, vector<8x32xf32> -> vector<8x32xf32>
    %c0_73 = arith.constant 0 : index
    %c0_74 = arith.constant 0 : index
    %147 = vector.load %arg21[%c0_73, %c0_74] : memref<8x256xf32, #tpu.memory_space<vmem>>, vector<8x32xf32>
    tpu.vector_store %arg21[%c0_73, %c0_74], %146 {strides = array<i32>} : memref<8x256xf32, #tpu.memory_space<vmem>>, vector<8x32xf32>,
    %148 = vector.extract_strided_slice %113 {offsets = [0, 32], sizes = [8, 32], strides = [1, 1]} : vector<8x256xf32> to vector<8x32xf32>
    %149 = arith.truncf %148 : vector<8x32xf32> to vector<8x32xbf16>
    %150 = vector.extract_strided_slice %114 {offsets = [0, 32], sizes = [8, 32], strides = [1, 1]} : vector<8x256xf32> to vector<8x32xf32>
    %151 = arith.truncf %150 : vector<8x32xf32> to vector<8x32xbf16>
    %152 = vector.extract_strided_slice %115 {offsets = [0, 32], sizes = [8, 32], strides = [1, 1]} : vector<8x256xf32> to vector<8x32xf32>
    %153 = arith.truncf %152 : vector<8x32xf32> to vector<8x32xbf16>
    %cst_75 = arith.constant dense<0.000000e+00> : vector<8x8xf32>
    %154 = tpu.matmul %149, %151, %cst_75 {dimension_numbers = #tpu.dot_dimension_numbers<[1], [1], [0], [0], [0, 0, 1, 0], [], []>} : vector<8x32xbf16>, vector<8x32xbf16>, vector<8x8xf32> -> vector<8x8xf32>
    %cst_76 = arith.constant 0.176776692 : f32
    %155 = vector.broadcast %cst_76 : f32 to vector<8x8xf32>
    %156 = arith.mulf %154, %155 : vector<8x8xf32>
    %157 = arith.mulf %156, %118 : vector<8x8xf32>
    %158 = arith.addf %157, %122 : vector<8x8xf32>
    %cst_77 = arith.constant dense<0xFF800000> : vector<8xf32>
    %159 = vector.multi_reduction <maximumf>, %158, %cst_77 [1] : vector<8x8xf32> to vector<8xf32>
    %160 = vector.shape_cast %159 : vector<8xf32> to vector<8x1xf32>
    %161 = vector.broadcast %160 : vector<8x1xf32> to vector<8x8xf32>
    %162 = arith.subf %158, %161 : vector<8x8xf32>
    %163 = math.exp %162 : vector<8x8xf32>
    %cst_78 = arith.constant dense<0.000000e+00> : vector<8xf32>
    %164 = vector.multi_reduction <add>, %163, %cst_78 [1] : vector<8x8xf32> to vector<8xf32>
    %165 = vector.shape_cast %164 : vector<8xf32> to vector<8x1xf32>
    %166 = tpu.reciprocal %165 {approx = true} : vector<8x1xf32> -> vector<8x1xf32>
    %167 = vector.broadcast %166 : vector<8x1xf32> to vector<8x8xf32>
    %168 = arith.mulf %163, %167 : vector<8x8xf32>
    %169 = arith.mulf %168, %118 : vector<8x8xf32>
    %170 = arith.truncf %169 : vector<8x8xf32> to vector<8x8xbf16>
    %cst_79 = arith.constant dense<0.000000e+00> : vector<8x32xf32>
    %171 = tpu.matmul %170, %153, %cst_79 {dimension_numbers = #tpu.dot_dimension_numbers<[1], [0], [0], [1], [0, 0, 1, 1], [], []>} : vector<8x8xbf16>, vector<8x32xbf16>, vector<8x32xf32> -> vector<8x32xf32>
    %c0_80 = arith.constant 0 : index
    %c32 = arith.constant 32 : index
    %172 = vector.load %arg21[%c0_80, %c32] : memref<8x256xf32, #tpu.memory_space<vmem>>, vector<8x32xf32>
    tpu.vector_store %arg21[%c0_80, %c32], %171 {strides = array<i32>} : memref<8x256xf32, #tpu.memory_space<vmem>>, vector<8x32xf32>,
    %173 = vector.extract_strided_slice %113 {offsets = [0, 64], sizes = [8, 32], strides = [1, 1]} : vector<8x256xf32> to vector<8x32xf32>
    %174 = arith.truncf %173 : vector<8x32xf32> to vector<8x32xbf16>
    %175 = vector.extract_strided_slice %114 {offsets = [0, 64], sizes = [8, 32], strides = [1, 1]} : vector<8x256xf32> to vector<8x32xf32>
    %176 = arith.truncf %175 : vector<8x32xf32> to vector<8x32xbf16>
    %177 = vector.extract_strided_slice %115 {offsets = [0, 64], sizes = [8, 32], strides = [1, 1]} : vector<8x256xf32> to vector<8x32xf32>
    %178 = arith.truncf %177 : vector<8x32xf32> to vector<8x32xbf16>
    %cst_81 = arith.constant dense<0.000000e+00> : vector<8x8xf32>
    %179 = tpu.matmul %174, %176, %cst_81 {dimension_numbers = #tpu.dot_dimension_numbers<[1], [1], [0], [0], [0, 0, 1, 0], [], []>} : vector<8x32xbf16>, vector<8x32xbf16>, vector<8x8xf32> -> vector<8x8xf32>
    %cst_82 = arith.constant 0.176776692 : f32
    %180 = vector.broadcast %cst_82 : f32 to vector<8x8xf32>
    %181 = arith.mulf %179, %180 : vector<8x8xf32>
    %182 = arith.mulf %181, %118 : vector<8x8xf32>
    %183 = arith.addf %182, %122 : vector<8x8xf32>
    %cst_83 = arith.constant dense<0xFF800000> : vector<8xf32>
    %184 = vector.multi_reduction <maximumf>, %183, %cst_83 [1] : vector<8x8xf32> to vector<8xf32>
    %185 = vector.shape_cast %184 : vector<8xf32> to vector<8x1xf32>
    %186 = vector.broadcast %185 : vector<8x1xf32> to vector<8x8xf32>
    %187 = arith.subf %183, %186 : vector<8x8xf32>
    %188 = math.exp %187 : vector<8x8xf32>
    %cst_84 = arith.constant dense<0.000000e+00> : vector<8xf32>
    %189 = vector.multi_reduction <add>, %188, %cst_84 [1] : vector<8x8xf32> to vector<8xf32>
    %190 = vector.shape_cast %189 : vector<8xf32> to vector<8x1xf32>
    %191 = tpu.reciprocal %190 {approx = true} : vector<8x1xf32> -> vector<8x1xf32>
    %192 = vector.broadcast %191 : vector<8x1xf32> to vector<8x8xf32>
    %193 = arith.mulf %188, %192 : vector<8x8xf32>
    %194 = arith.mulf %193, %118 : vector<8x8xf32>
    %195 = arith.truncf %194 : vector<8x8xf32> to vector<8x8xbf16>
    %cst_85 = arith.constant dense<0.000000e+00> : vector<8x32xf32>
    %196 = tpu.matmul %195, %178, %cst_85 {dimension_numbers = #tpu.dot_dimension_numbers<[1], [0], [0], [1], [0, 0, 1, 1], [], []>} : vector<8x8xbf16>, vector<8x32xbf16>, vector<8x32xf32> -> vector<8x32xf32>
    %c0_86 = arith.constant 0 : index
    %c64 = arith.constant 64 : index
    %197 = vector.load %arg21[%c0_86, %c64] : memref<8x256xf32, #tpu.memory_space<vmem>>, vector<8x32xf32>
    tpu.vector_store %arg21[%c0_86, %c64], %196 {strides = array<i32>} : memref<8x256xf32, #tpu.memory_space<vmem>>, vector<8x32xf32>,
    %198 = vector.extract_strided_slice %113 {offsets = [0, 96], sizes = [8, 32], strides = [1, 1]} : vector<8x256xf32> to vector<8x32xf32>
    %199 = arith.truncf %198 : vector<8x32xf32> to vector<8x32xbf16>
    %200 = vector.extract_strided_slice %114 {offsets = [0, 96], sizes = [8, 32], strides = [1, 1]} : vector<8x256xf32> to vector<8x32xf32>
    %201 = arith.truncf %200 : vector<8x32xf32> to vector<8x32xbf16>
    %202 = vector.extract_strided_slice %115 {offsets = [0, 96], sizes = [8, 32], strides = [1, 1]} : vector<8x256xf32> to vector<8x32xf32>
    %203 = arith.truncf %202 : vector<8x32xf32> to vector<8x32xbf16>
    %cst_87 = arith.constant dense<0.000000e+00> : vector<8x8xf32>
    %204 = tpu.matmul %199, %201, %cst_87 {dimension_numbers = #tpu.dot_dimension_numbers<[1], [1], [0], [0], [0, 0, 1, 0], [], []>} : vector<8x32xbf16>, vector<8x32xbf16>, vector<8x8xf32> -> vector<8x8xf32>
    %cst_88 = arith.constant 0.176776692 : f32
    %205 = vector.broadcast %cst_88 : f32 to vector<8x8xf32>
    %206 = arith.mulf %204, %205 : vector<8x8xf32>
    %207 = arith.mulf %206, %118 : vector<8x8xf32>
    %208 = arith.addf %207, %122 : vector<8x8xf32>
    %cst_89 = arith.constant dense<0xFF800000> : vector<8xf32>
    %209 = vector.multi_reduction <maximumf>, %208, %cst_89 [1] : vector<8x8xf32> to vector<8xf32>
    %210 = vector.shape_cast %209 : vector<8xf32> to vector<8x1xf32>
    %211 = vector.broadcast %210 : vector<8x1xf32> to vector<8x8xf32>
    %212 = arith.subf %208, %211 : vector<8x8xf32>
    %213 = math.exp %212 : vector<8x8xf32>
    %cst_90 = arith.constant dense<0.000000e+00> : vector<8xf32>
    %214 = vector.multi_reduction <add>, %213, %cst_90 [1] : vector<8x8xf32> to vector<8xf32>
    %215 = vector.shape_cast %214 : vector<8xf32> to vector<8x1xf32>
    %216 = tpu.reciprocal %215 {approx = true} : vector<8x1xf32> -> vector<8x1xf32>
    %217 = vector.broadcast %216 : vector<8x1xf32> to vector<8x8xf32>
    %218 = arith.mulf %213, %217 : vector<8x8xf32>
    %219 = arith.mulf %218, %118 : vector<8x8xf32>
    %220 = arith.truncf %219 : vector<8x8xf32> to vector<8x8xbf16>
    %cst_91 = arith.constant dense<0.000000e+00> : vector<8x32xf32>
    %221 = tpu.matmul %220, %203, %cst_91 {dimension_numbers = #tpu.dot_dimension_numbers<[1], [0], [0], [1], [0, 0, 1, 1], [], []>} : vector<8x8xbf16>, vector<8x32xbf16>, vector<8x32xf32> -> vector<8x32xf32>
    %c0_92 = arith.constant 0 : index
    %c96 = arith.constant 96 : index
    %222 = vector.load %arg21[%c0_92, %c96] : memref<8x256xf32, #tpu.memory_space<vmem>>, vector<8x32xf32>
    tpu.vector_store %arg21[%c0_92, %c96], %221 {strides = array<i32>} : memref<8x256xf32, #tpu.memory_space<vmem>>, vector<8x32xf32>,
    %223 = vector.extract_strided_slice %113 {offsets = [0, 128], sizes = [8, 32], strides = [1, 1]} : vector<8x256xf32> to vector<8x32xf32>
    %224 = arith.truncf %223 : vector<8x32xf32> to vector<8x32xbf16>
    %225 = vector.extract_strided_slice %114 {offsets = [0, 128], sizes = [8, 32], strides = [1, 1]} : vector<8x256xf32> to vector<8x32xf32>
    %226 = arith.truncf %225 : vector<8x32xf32> to vector<8x32xbf16>
    %227 = vector.extract_strided_slice %115 {offsets = [0, 128], sizes = [8, 32], strides = [1, 1]} : vector<8x256xf32> to vector<8x32xf32>
    %228 = arith.truncf %227 : vector<8x32xf32> to vector<8x32xbf16>
    %cst_93 = arith.constant dense<0.000000e+00> : vector<8x8xf32>
    %229 = tpu.matmul %224, %226, %cst_93 {dimension_numbers = #tpu.dot_dimension_numbers<[1], [1], [0], [0], [0, 0, 1, 0], [], []>} : vector<8x32xbf16>, vector<8x32xbf16>, vector<8x8xf32> -> vector<8x8xf32>
    %cst_94 = arith.constant 0.176776692 : f32
    %230 = vector.broadcast %cst_94 : f32 to vector<8x8xf32>
    %231 = arith.mulf %229, %230 : vector<8x8xf32>
    %232 = arith.mulf %231, %118 : vector<8x8xf32>
    %233 = arith.addf %232, %122 : vector<8x8xf32>
    %cst_95 = arith.constant dense<0xFF800000> : vector<8xf32>
    %234 = vector.multi_reduction <maximumf>, %233, %cst_95 [1] : vector<8x8xf32> to vector<8xf32>
    %235 = vector.shape_cast %234 : vector<8xf32> to vector<8x1xf32>
    %236 = vector.broadcast %235 : vector<8x1xf32> to vector<8x8xf32>
    %237 = arith.subf %233, %236 : vector<8x8xf32>
    %238 = math.exp %237 : vector<8x8xf32>
    %cst_96 = arith.constant dense<0.000000e+00> : vector<8xf32>
    %239 = vector.multi_reduction <add>, %238, %cst_96 [1] : vector<8x8xf32> to vector<8xf32>
    %240 = vector.shape_cast %239 : vector<8xf32> to vector<8x1xf32>
    %241 = tpu.reciprocal %240 {approx = true} : vector<8x1xf32> -> vector<8x1xf32>
    %242 = vector.broadcast %241 : vector<8x1xf32> to vector<8x8xf32>
    %243 = arith.mulf %238, %242 : vector<8x8xf32>
    %244 = arith.mulf %243, %118 : vector<8x8xf32>
    %245 = arith.truncf %244 : vector<8x8xf32> to vector<8x8xbf16>
    %cst_97 = arith.constant dense<0.000000e+00> : vector<8x32xf32>
    %246 = tpu.matmul %245, %228, %cst_97 {dimension_numbers = #tpu.dot_dimension_numbers<[1], [0], [0], [1], [0, 0, 1, 1], [], []>} : vector<8x8xbf16>, vector<8x32xbf16>, vector<8x32xf32> -> vector<8x32xf32>
    %c0_98 = arith.constant 0 : index
    %c128 = arith.constant 128 : index
    %247 = vector.load %arg21[%c0_98, %c128] : memref<8x256xf32, #tpu.memory_space<vmem>>, vector<8x32xf32>
    tpu.vector_store %arg21[%c0_98, %c128], %246 {strides = array<i32>} : memref<8x256xf32, #tpu.memory_space<vmem>>, vector<8x32xf32>,
    %248 = vector.extract_strided_slice %113 {offsets = [0, 160], sizes = [8, 32], strides = [1, 1]} : vector<8x256xf32> to vector<8x32xf32>
    %249 = arith.truncf %248 : vector<8x32xf32> to vector<8x32xbf16>
    %250 = vector.extract_strided_slice %114 {offsets = [0, 160], sizes = [8, 32], strides = [1, 1]} : vector<8x256xf32> to vector<8x32xf32>
    %251 = arith.truncf %250 : vector<8x32xf32> to vector<8x32xbf16>
    %252 = vector.extract_strided_slice %115 {offsets = [0, 160], sizes = [8, 32], strides = [1, 1]} : vector<8x256xf32> to vector<8x32xf32>
    %253 = arith.truncf %252 : vector<8x32xf32> to vector<8x32xbf16>
    %cst_99 = arith.constant dense<0.000000e+00> : vector<8x8xf32>
    %254 = tpu.matmul %249, %251, %cst_99 {dimension_numbers = #tpu.dot_dimension_numbers<[1], [1], [0], [0], [0, 0, 1, 0], [], []>} : vector<8x32xbf16>, vector<8x32xbf16>, vector<8x8xf32> -> vector<8x8xf32>
    %cst_100 = arith.constant 0.176776692 : f32
    %255 = vector.broadcast %cst_100 : f32 to vector<8x8xf32>
    %256 = arith.mulf %254, %255 : vector<8x8xf32>
    %257 = arith.mulf %256, %118 : vector<8x8xf32>
    %258 = arith.addf %257, %122 : vector<8x8xf32>
    %cst_101 = arith.constant dense<0xFF800000> : vector<8xf32>
    %259 = vector.multi_reduction <maximumf>, %258, %cst_101 [1] : vector<8x8xf32> to vector<8xf32>
    %260 = vector.shape_cast %259 : vector<8xf32> to vector<8x1xf32>
    %261 = vector.broadcast %260 : vector<8x1xf32> to vector<8x8xf32>
    %262 = arith.subf %258, %261 : vector<8x8xf32>
    %263 = math.exp %262 : vector<8x8xf32>
    %cst_102 = arith.constant dense<0.000000e+00> : vector<8xf32>
    %264 = vector.multi_reduction <add>, %263, %cst_102 [1] : vector<8x8xf32> to vector<8xf32>
    %265 = vector.shape_cast %264 : vector<8xf32> to vector<8x1xf32>
    %266 = tpu.reciprocal %265 {approx = true} : vector<8x1xf32> -> vector<8x1xf32>
    %267 = vector.broadcast %266 : vector<8x1xf32> to vector<8x8xf32>
    %268 = arith.mulf %263, %267 : vector<8x8xf32>
    %269 = arith.mulf %268, %118 : vector<8x8xf32>
    %270 = arith.truncf %269 : vector<8x8xf32> to vector<8x8xbf16>
    %cst_103 = arith.constant dense<0.000000e+00> : vector<8x32xf32>
    %271 = tpu.matmul %270, %253, %cst_103 {dimension_numbers = #tpu.dot_dimension_numbers<[1], [0], [0], [1], [0, 0, 1, 1], [], []>} : vector<8x8xbf16>, vector<8x32xbf16>, vector<8x32xf32> -> vector<8x32xf32>
    %c0_104 = arith.constant 0 : index
    %c160 = arith.constant 160 : index
    %272 = vector.load %arg21[%c0_104, %c160] : memref<8x256xf32, #tpu.memory_space<vmem>>, vector<8x32xf32>
    tpu.vector_store %arg21[%c0_104, %c160], %271 {strides = array<i32>} : memref<8x256xf32, #tpu.memory_space<vmem>>, vector<8x32xf32>,
    %273 = vector.extract_strided_slice %113 {offsets = [0, 192], sizes = [8, 32], strides = [1, 1]} : vector<8x256xf32> to vector<8x32xf32>
    %274 = arith.truncf %273 : vector<8x32xf32> to vector<8x32xbf16>
    %275 = vector.extract_strided_slice %114 {offsets = [0, 192], sizes = [8, 32], strides = [1, 1]} : vector<8x256xf32> to vector<8x32xf32>
    %276 = arith.truncf %275 : vector<8x32xf32> to vector<8x32xbf16>
    %277 = vector.extract_strided_slice %115 {offsets = [0, 192], sizes = [8, 32], strides = [1, 1]} : vector<8x256xf32> to vector<8x32xf32>
    %278 = arith.truncf %277 : vector<8x32xf32> to vector<8x32xbf16>
    %cst_105 = arith.constant dense<0.000000e+00> : vector<8x8xf32>
    %279 = tpu.matmul %274, %276, %cst_105 {dimension_numbers = #tpu.dot_dimension_numbers<[1], [1], [0], [0], [0, 0, 1, 0], [], []>} : vector<8x32xbf16>, vector<8x32xbf16>, vector<8x8xf32> -> vector<8x8xf32>
    %cst_106 = arith.constant 0.176776692 : f32
    %280 = vector.broadcast %cst_106 : f32 to vector<8x8xf32>
    %281 = arith.mulf %279, %280 : vector<8x8xf32>
    %282 = arith.mulf %281, %118 : vector<8x8xf32>
    %283 = arith.addf %282, %122 : vector<8x8xf32>
    %cst_107 = arith.constant dense<0xFF800000> : vector<8xf32>
    %284 = vector.multi_reduction <maximumf>, %283, %cst_107 [1] : vector<8x8xf32> to vector<8xf32>
    %285 = vector.shape_cast %284 : vector<8xf32> to vector<8x1xf32>
    %286 = vector.broadcast %285 : vector<8x1xf32> to vector<8x8xf32>
    %287 = arith.subf %283, %286 : vector<8x8xf32>
    %288 = math.exp %287 : vector<8x8xf32>
    %cst_108 = arith.constant dense<0.000000e+00> : vector<8xf32>
    %289 = vector.multi_reduction <add>, %288, %cst_108 [1] : vector<8x8xf32> to vector<8xf32>
    %290 = vector.shape_cast %289 : vector<8xf32> to vector<8x1xf32>
    %291 = tpu.reciprocal %290 {approx = true} : vector<8x1xf32> -> vector<8x1xf32>
    %292 = vector.broadcast %291 : vector<8x1xf32> to vector<8x8xf32>
    %293 = arith.mulf %288, %292 : vector<8x8xf32>
    %294 = arith.mulf %293, %118 : vector<8x8xf32>
    %295 = arith.truncf %294 : vector<8x8xf32> to vector<8x8xbf16>
    %cst_109 = arith.constant dense<0.000000e+00> : vector<8x32xf32>
    %296 = tpu.matmul %295, %278, %cst_109 {dimension_numbers = #tpu.dot_dimension_numbers<[1], [0], [0], [1], [0, 0, 1, 1], [], []>} : vector<8x8xbf16>, vector<8x32xbf16>, vector<8x32xf32> -> vector<8x32xf32>
    %c0_110 = arith.constant 0 : index
    %c192 = arith.constant 192 : index
    %297 = vector.load %arg21[%c0_110, %c192] : memref<8x256xf32, #tpu.memory_space<vmem>>, vector<8x32xf32>
    tpu.vector_store %arg21[%c0_110, %c192], %296 {strides = array<i32>} : memref<8x256xf32, #tpu.memory_space<vmem>>, vector<8x32xf32>,
    %298 = vector.extract_strided_slice %113 {offsets = [0, 224], sizes = [8, 32], strides = [1, 1]} : vector<8x256xf32> to vector<8x32xf32>
    %299 = arith.truncf %298 : vector<8x32xf32> to vector<8x32xbf16>
    %300 = vector.extract_strided_slice %114 {offsets = [0, 224], sizes = [8, 32], strides = [1, 1]} : vector<8x256xf32> to vector<8x32xf32>
    %301 = arith.truncf %300 : vector<8x32xf32> to vector<8x32xbf16>
    %302 = vector.extract_strided_slice %115 {offsets = [0, 224], sizes = [8, 32], strides = [1, 1]} : vector<8x256xf32> to vector<8x32xf32>
    %303 = arith.truncf %302 : vector<8x32xf32> to vector<8x32xbf16>
    %cst_111 = arith.constant dense<0.000000e+00> : vector<8x8xf32>
    %304 = tpu.matmul %299, %301, %cst_111 {dimension_numbers = #tpu.dot_dimension_numbers<[1], [1], [0], [0], [0, 0, 1, 0], [], []>} : vector<8x32xbf16>, vector<8x32xbf16>, vector<8x8xf32> -> vector<8x8xf32>
    %cst_112 = arith.constant 0.176776692 : f32
    %305 = vector.broadcast %cst_112 : f32 to vector<8x8xf32>
    %306 = arith.mulf %304, %305 : vector<8x8xf32>
    %307 = arith.mulf %306, %118 : vector<8x8xf32>
    %308 = arith.addf %307, %122 : vector<8x8xf32>
    %cst_113 = arith.constant dense<0xFF800000> : vector<8xf32>
    %309 = vector.multi_reduction <maximumf>, %308, %cst_113 [1] : vector<8x8xf32> to vector<8xf32>
    %310 = vector.shape_cast %309 : vector<8xf32> to vector<8x1xf32>
    %311 = vector.broadcast %310 : vector<8x1xf32> to vector<8x8xf32>
    %312 = arith.subf %308, %311 : vector<8x8xf32>
    %313 = math.exp %312 : vector<8x8xf32>
    %cst_114 = arith.constant dense<0.000000e+00> : vector<8xf32>
    %314 = vector.multi_reduction <add>, %313, %cst_114 [1] : vector<8x8xf32> to vector<8xf32>
    %315 = vector.shape_cast %314 : vector<8xf32> to vector<8x1xf32>
    %316 = tpu.reciprocal %315 {approx = true} : vector<8x1xf32> -> vector<8x1xf32>
    %317 = vector.broadcast %316 : vector<8x1xf32> to vector<8x8xf32>
    %318 = arith.mulf %313, %317 : vector<8x8xf32>
    %319 = arith.mulf %318, %118 : vector<8x8xf32>
    %320 = arith.truncf %319 : vector<8x8xf32> to vector<8x8xbf16>
    %cst_115 = arith.constant dense<0.000000e+00> : vector<8x32xf32>
    %321 = tpu.matmul %320, %303, %cst_115 {dimension_numbers = #tpu.dot_dimension_numbers<[1], [0], [0], [1], [0, 0, 1, 1], [], []>} : vector<8x8xbf16>, vector<8x32xbf16>, vector<8x32xf32> -> vector<8x32xf32>
    %c0_116 = arith.constant 0 : index
    %c224 = arith.constant 224 : index
    %322 = vector.load %arg21[%c0_116, %c224] : memref<8x256xf32, #tpu.memory_space<vmem>>, vector<8x32xf32>
    tpu.vector_store %arg21[%c0_116, %c224], %321 {strides = array<i32>} : memref<8x256xf32, #tpu.memory_space<vmem>>, vector<8x32xf32>,
    %c0_117 = arith.constant 0 : index
    %c0_118 = arith.constant 0 : index
    %323 = vector.load %arg21[%c0_117, %c0_118] : memref<8x256xf32, #tpu.memory_space<vmem>>, vector<8x256xf32>
    %324 = arith.truncf %323 : vector<8x256xf32> to vector<8x256xbf16>
    %c0_119 = arith.constant 0 : index
    %c0_120 = arith.constant 0 : index
    %325 = vector.load %arg13[%c0_119, %c0_120] : memref<256x32xbf16, #tpu.memory_space<vmem>>, vector<256x32xbf16>
    %cst_121 = arith.constant dense<0.000000e+00> : vector<8x32xf32>
    %326 = tpu.matmul %324, %325, %cst_121 {dimension_numbers = #tpu.dot_dimension_numbers<[1], [0], [0], [1], [0, 0, 1, 1], [], []>} : vector<8x256xbf16>, vector<256x32xbf16>, vector<8x32xf32> -> vector<8x32xf32>
    %c0_122 = arith.constant 0 : index
    %c0_123 = arith.constant 0 : index
    %327 = vector.load %arg14[%c0_122, %c0_123] : memref<1x32xf32, #tpu.memory_space<vmem>>, vector<1x32xf32>
    %328 = vector.broadcast %327 : vector<1x32xf32> to vector<8x32xf32>
    %329 = arith.addf %326, %328 : vector<8x32xf32>
    %330 = arith.addf %329, %84 : vector<8x32xf32>
    %331 = vector.broadcast %3 : vector<8x1xf32> to vector<8x32xf32>
    %332 = arith.mulf %330, %331 : vector<8x32xf32>
    %cst_124 = arith.constant dense<0.000000e+00> : vector<8xf32>
    %333 = vector.multi_reduction <add>, %332, %cst_124 [1] : vector<8x32xf32> to vector<8xf32>
    %334 = vector.shape_cast %333 : vector<8xf32> to vector<8x1xf32>
    %cst_125 = arith.constant 3.200000e+01 : f32
    %335 = vector.broadcast %cst_125 : f32 to vector<8x1xf32>
    %336 = arith.divf %334, %335 : vector<8x1xf32>
    %337 = vector.broadcast %336 : vector<8x1xf32> to vector<8x32xf32>
    %338 = arith.subf %332, %337 : vector<8x32xf32>
    %339 = arith.mulf %338, %338 : vector<8x32xf32>
    %cst_126 = arith.constant dense<0.000000e+00> : vector<8xf32>
    %340 = vector.multi_reduction <add>, %339, %cst_126 [1] : vector<8x32xf32> to vector<8xf32>
    %341 = vector.shape_cast %340 : vector<8xf32> to vector<8x1xf32>
    %cst_127 = arith.constant 3.200000e+01 : f32
    %342 = vector.broadcast %cst_127 : f32 to vector<8x1xf32>
    %343 = arith.divf %341, %342 : vector<8x1xf32>
    %344 = vector.broadcast %336 : vector<8x1xf32> to vector<8x32xf32>
    %345 = arith.subf %332, %344 : vector<8x32xf32>
    %cst_128 = arith.constant 9.99999974E-6 : f32
    %346 = vector.broadcast %cst_128 : f32 to vector<8x1xf32>
    %347 = arith.addf %343, %346 : vector<8x1xf32>
    %348 = math.rsqrt %347 : vector<8x1xf32>
    %349 = vector.broadcast %348 : vector<8x1xf32> to vector<8x32xf32>
    %350 = arith.mulf %345, %349 : vector<8x32xf32>
    %351 = vector.broadcast %0 : vector<1x32xf32> to vector<8x32xf32>
    %352 = arith.mulf %350, %351 : vector<8x32xf32>
    %353 = vector.broadcast %1 : vector<1x32xf32> to vector<8x32xf32>
    %354 = arith.addf %352, %353 : vector<8x32xf32>
    %355 = arith.truncf %354 : vector<8x32xf32> to vector<8x32xbf16>
    %c0_129 = arith.constant 0 : index
    %c0_130 = arith.constant 0 : index
    %356 = vector.load %arg15[%c0_129, %c0_130] : memref<32x128xbf16, #tpu.memory_space<vmem>>, vector<32x128xbf16>
    %cst_131 = arith.constant dense<0.000000e+00> : vector<8x128xf32>
    %357 = tpu.matmul %355, %356, %cst_131 {dimension_numbers = #tpu.dot_dimension_numbers<[1], [0], [0], [1], [0, 0, 1, 1], [], []>} : vector<8x32xbf16>, vector<32x128xbf16>, vector<8x128xf32> -> vector<8x128xf32>
    %c0_132 = arith.constant 0 : index
    %c0_133 = arith.constant 0 : index
    %358 = vector.load %arg16[%c0_132, %c0_133] : memref<1x128xf32, #tpu.memory_space<vmem>>, vector<1x128xf32>
    %359 = vector.broadcast %358 : vector<1x128xf32> to vector<8x128xf32>
    %360 = arith.addf %357, %359 : vector<8x128xf32>
    %cst_134 = arith.constant 0.000000e+00 : f32
    %361 = vector.broadcast %cst_134 : f32 to vector<8x128xf32>
    %362 = arith.maximumf %360, %361 : vector<8x128xf32>
    %363 = arith.truncf %362 : vector<8x128xf32> to vector<8x128xbf16>
    %c0_135 = arith.constant 0 : index
    %c0_136 = arith.constant 0 : index
    %364 = vector.load %arg17[%c0_135, %c0_136] : memref<128x32xbf16, #tpu.memory_space<vmem>>, vector<128x32xbf16>
    %cst_137 = arith.constant dense<0.000000e+00> : vector<8x32xf32>
    %365 = tpu.matmul %363, %364, %cst_137 {dimension_numbers = #tpu.dot_dimension_numbers<[1], [0], [0], [1], [0, 0, 1, 1], [], []>} : vector<8x128xbf16>, vector<128x32xbf16>, vector<8x32xf32> -> vector<8x32xf32>
    %c0_138 = arith.constant 0 : index
    %c0_139 = arith.constant 0 : index
    %366 = vector.load %arg18[%c0_138, %c0_139] : memref<1x32xf32, #tpu.memory_space<vmem>>, vector<1x32xf32>
    %367 = vector.broadcast %366 : vector<1x32xf32> to vector<8x32xf32>
    %368 = arith.addf %365, %367 : vector<8x32xf32>
    %369 = arith.addf %368, %332 : vector<8x32xf32>
    %370 = vector.broadcast %3 : vector<8x1xf32> to vector<8x32xf32>
    %371 = arith.mulf %369, %370 : vector<8x32xf32>
    %c0_140 = arith.constant 0 : index
    %c0_141 = arith.constant 0 : index
    %c0_142 = arith.constant 0 : index
    %372 = vector.load %arg19[%c0_140, %c0_141, %c0_142] : memref<1x8x32xf32, #tpu.memory_space<vmem>>, vector<1x8x32xf32>
    %373 = vector.shape_cast %372 : vector<1x8x32xf32> to vector<8x32xf32>
    %374 = vector.shape_cast %371 : vector<8x32xf32> to vector<1x8x32xf32>
    tpu.vector_store %arg19[%c0_140, %c0_141, %c0_142], %374 {strides = array<i32>} : memref<1x8x32xf32, #tpu.memory_space<vmem>>, vector<1x8x32xf32>,
    return
  }
  func.func @transform_0(%arg0: i32) -> (i32, i32, i32) {
    %c0_i32 = arith.constant 0 : i32
    %c0_i32_0 = arith.constant 0 : i32
    %c0_i32_1 = arith.constant 0 : i32
    return %arg0, %c0_i32, %c0_i32_0 : i32, i32, i32
  }
  func.func @transform_1(%arg0: i32) -> (i32, i32, i32) {
    %c0_i32 = arith.constant 0 : i32
    %c0_i32_0 = arith.constant 0 : i32
    %c0_i32_1 = arith.constant 0 : i32
    return %arg0, %c0_i32, %c0_i32_0 : i32, i32, i32
  }
  func.func @transform_2(%arg0: i32) -> (i32, i32, i32) {
    %c0_i32 = arith.constant 0 : i32
    %c0_i32_0 = arith.constant 0 : i32
    %c0_i32_1 = arith.constant 0 : i32
    return %arg0, %c0_i32, %c0_i32_0 : i32, i32, i32
  }
  func.func @transform_3(%arg0: i32) -> (i32, i32) {
    %c0_i32 = arith.constant 0 : i32
    %c0_i32_0 = arith.constant 0 : i32
    %c0_i32_1 = arith.constant 0 : i32
    return %c0_i32, %c0_i32_0 : i32, i32
  }
  func.func @transform_4(%arg0: i32) -> (i32, i32) {
    %c0_i32 = arith.constant 0 : i32
    %c0_i32_0 = arith.constant 0 : i32
    %c0_i32_1 = arith.constant 0 : i32
    return %c0_i32, %c0_i32_0 : i32, i32
  }
  func.func @transform_5(%arg0: i32) -> (i32, i32) {
    %c0_i32 = arith.constant 0 : i32
    %c0_i32_0 = arith.constant 0 : i32
    %c0_i32_1 = arith.constant 0 : i32
    return %c0_i32, %c0_i32_0 : i32, i32
  }
  func.func @transform_6(%arg0: i32) -> (i32, i32) {
    %c0_i32 = arith.constant 0 : i32
    %c0_i32_0 = arith.constant 0 : i32
    %c0_i32_1 = arith.constant 0 : i32
    return %c0_i32, %c0_i32_0 : i32, i32
  }
  func.func @transform_7(%arg0: i32) -> (i32, i32) {
    %c0_i32 = arith.constant 0 : i32
    %c0_i32_0 = arith.constant 0 : i32
    %c0_i32_1 = arith.constant 0 : i32
    return %c0_i32, %c0_i32_0 : i32, i32
  }
  func.func @transform_8(%arg0: i32) -> (i32, i32) {
    %c0_i32 = arith.constant 0 : i32
    %c0_i32_0 = arith.constant 0 : i32
    %c0_i32_1 = arith.constant 0 : i32
    return %c0_i32, %c0_i32_0 : i32, i32
  }
  func.func @transform_9(%arg0: i32) -> (i32, i32) {
    %c0_i32 = arith.constant 0 : i32
    %c0_i32_0 = arith.constant 0 : i32
    %c0_i32_1 = arith.constant 0 : i32
    return %c0_i32, %c0_i32_0 : i32, i32
  }
  func.func @transform_10(%arg0: i32) -> (i32, i32) {
    %c0_i32 = arith.constant 0 : i32
    %c0_i32_0 = arith.constant 0 : i32
    %c0_i32_1 = arith.constant 0 : i32
    return %c0_i32, %c0_i32_0 : i32, i32
  }
  func.func @transform_11(%arg0: i32) -> (i32, i32) {
    %c0_i32 = arith.constant 0 : i32
    %c0_i32_0 = arith.constant 0 : i32
    %c0_i32_1 = arith.constant 0 : i32
    return %c0_i32, %c0_i32_0 : i32, i32
  }
  func.func @transform_12(%arg0: i32) -> (i32, i32) {
    %c0_i32 = arith.constant 0 : i32
    %c0_i32_0 = arith.constant 0 : i32
    %c0_i32_1 = arith.constant 0 : i32
    return %c0_i32, %c0_i32_0 : i32, i32
  }
  func.func @transform_13(%arg0: i32) -> (i32, i32) {
    %c0_i32 = arith.constant 0 : i32
    %c0_i32_0 = arith.constant 0 : i32
    %c0_i32_1 = arith.constant 0 : i32
    return %c0_i32, %c0_i32_0 : i32, i32
  }
  func.func @transform_14(%arg0: i32) -> (i32, i32) {
    %c0_i32 = arith.constant 0 : i32
    %c0_i32_0 = arith.constant 0 : i32
    %c0_i32_1 = arith.constant 0 : i32
    return %c0_i32, %c0_i32_0 : i32, i32
  }
  func.func @transform_15(%arg0: i32) -> (i32, i32) {
    %c0_i32 = arith.constant 0 : i32
    %c0_i32_0 = arith.constant 0 : i32
    %c0_i32_1 = arith.constant 0 : i32
    return %c0_i32, %c0_i32_0 : i32, i32
  }
  func.func @transform_16(%arg0: i32) -> (i32, i32) {
    %c0_i32 = arith.constant 0 : i32
    %c0_i32_0 = arith.constant 0 : i32
    %c0_i32_1 = arith.constant 0 : i32
    return %c0_i32, %c0_i32_0 : i32, i32
  }
  func.func @transform_17(%arg0: i32) -> (i32, i32) {
    %c0_i32 = arith.constant 0 : i32
    %c0_i32_0 = arith.constant 0 : i32
    %c0_i32_1 = arith.constant 0 : i32
    return %c0_i32, %c0_i32_0 : i32, i32
  }
  func.func @transform_18(%arg0: i32) -> (i32, i32, i32) {
    %c0_i32 = arith.constant 0 : i32
    %c0_i32_0 = arith.constant 0 : i32
    %c0_i32_1 = arith.constant 0 : i32
    return %arg0, %c0_i32, %c0_i32_0 : i32, i32, i32
  }
}

</mosaic_0001>

<llo_original>
// kernel: tpu_custom_call.1
$region0: #{tpu_custom_call.1}
  #allocation0 [shape = 'u32[]', space=smem, size = 0x4, offset = 0x4, fixed_abs, tag = 'smem constant byte address 0x4 - core index']
  #allocation1 [shape = 'u32[72,128]{1,0:T(1,128)}', space=vmem, size = 0x9000, scoped, tag = 'internal scratch']
  #allocation2 [shape = 'f32[14,32]{1,0:T(8,128)}', space=vmem, size = 0x2000, scoped, tag = 'scratch operand']
  #allocation3 [shape = 'f32[8,256]{1,0:T(8,128)}', space=vmem, size = 0x2000, scoped, tag = 'scratch operand']
  %s0 = inlined_call_operand.vmem [shape: f32[2,8,32], index: 0, kind: input, shape index: {}]
  %s1 = inlined_call_operand.vmem [shape: f32[2,8,1], index: 1, kind: input, shape index: {}]
  %s2 = inlined_call_operand.vmem [shape: f32[2,1,8], index: 2, kind: input, shape index: {}]
  %s3 = inlined_call_operand.vmem [shape: f32[8,32], index: 3, kind: input, shape index: {}]
  %s4 = inlined_call_operand.vmem [shape: f32[1,32], index: 4, kind: input, shape index: {}]
  %s5 = inlined_call_operand.vmem [shape: f32[1,32], index: 5, kind: input, shape index: {}]
  %s6 = inlined_call_operand.vmem [shape: f32[7,32], index: 6, kind: input, shape index: {}]
  %s7 = inlined_call_operand.vmem [shape: f32[1,32], index: 7, kind: input, shape index: {}]
  %s8 = inlined_call_operand.vmem [shape: bf16[32,32], index: 8, kind: input, shape index: {}]
  %s9 = inlined_call_operand.vmem [shape: f32[1,32], index: 9, kind: input, shape index: {}]
  %s10 = inlined_call_operand.vmem [shape: bf16[32,768], index: 10, kind: input, shape index: {}]
  %s11 = inlined_call_operand.vmem [shape: f32[1,768], index: 11, kind: input, shape index: {}]
  %s12 = inlined_call_operand.vmem [shape: bf16[256,32], index: 12, kind: input, shape index: {}]
  %s13 = inlined_call_operand.vmem [shape: f32[1,32], index: 13, kind: input, shape index: {}]
  %s14 = inlined_call_operand.vmem [shape: bf16[32,128], index: 14, kind: input, shape index: {}]
  %s15 = inlined_call_operand.vmem [shape: f32[1,128], index: 15, kind: input, shape index: {}]
  %s16 = inlined_call_operand.vmem [shape: bf16[128,32], index: 16, kind: input, shape index: {}]
  %s17 = inlined_call_operand.vmem [shape: f32[1,32], index: 17, kind: input, shape index: {}]
  %s18 = inlined_call_operand.hbm [shape: f32[2,8,32], index: 18, kind: output, shape index: {}]
  %s19 = sld [smem:[#allocation0]]
  $region105: #{tpu_custom_call.1} parent=0
    _
  %s21 = ssub.s32 1, %s19
  %s22 = scalar_select 0, %s21, %s19
  $region1: #{tpu_custom_call.1} parent=0
    #allocation4 [shape = 'u8[8192]{0}', space=vmem, size = 0x2000, scoped, tag = 'output window, operand 0']
    #allocation5 [shape = 's32[2]{0}', space=sflag, size = 0x8, scoped, tag = 'scoped memory for tpu_custom_call.1']
    %23 = vsyncpa [#allocation5], 0
    %s24 = scalar_lea.sflag [#allocation5], 1
    %25 = vsyncpa %s24, 0
    loop: start=0, step=1, limit=4
    $region2: #{tpu_custom_call.1} parent=1 // loop_pre_header
      _
    $region3: #{tpu_custom_call.1} parent=1 // loop_header
      %s27 = sphi 0, %s31
      %p28 = scmp.ge.s32.totalorder %s27, 4
      %s37 = sphi 0, %s39
      %s40 = sphi 0, %s37
      %s41 = sphi 0, %s40
      %s57 = sphi 0, %s41
      %s63 = sphi 0, %s65
      %s66 = sphi 0, %s63
      %s67 = sphi 0, %s66
      %s83 = sphi 0, %s67
      %s89 = sphi 0, %s91
      %s92 = sphi 0, %s89
      %s93 = sphi 0, %s92
      %s109 = sphi 0, %s93
      %s113 = sphi 0, %s113
      %s115 = sphi 0, %s113
      %s116 = sphi 0, %s115
      %s130 = sphi 0, %s116
      %s134 = sphi 0, %s134
      %s136 = sphi 0, %s134
      %s137 = sphi 0, %s136
      %s151 = sphi 0, %s137
      %s155 = sphi 0, %s155
      %s157 = sphi 0, %s155
      %s158 = sphi 0, %s157
      %s172 = sphi 0, %s158
      %s176 = sphi 0, %s176
      %s178 = sphi 0, %s176
      %s179 = sphi 0, %s178
      %s193 = sphi 0, %s179
      %s197 = sphi 0, %s197
      %s199 = sphi 0, %s197
      %s200 = sphi 0, %s199
      %s214 = sphi 0, %s200
      %s218 = sphi 0, %s218
      %s220 = sphi 0, %s218
      %s221 = sphi 0, %s220
      %s235 = sphi 0, %s221
      %s239 = sphi 0, %s239
      %s241 = sphi 0, %s239
      %s242 = sphi 0, %s241
      %s256 = sphi 0, %s242
      %s260 = sphi 0, %s260
      %s262 = sphi 0, %s260
      %s263 = sphi 0, %s262
      %s277 = sphi 0, %s263
      %s281 = sphi 0, %s281
      %s283 = sphi 0, %s281
      %s284 = sphi 0, %s283
      %s298 = sphi 0, %s284
      %s302 = sphi 0, %s302
      %s304 = sphi 0, %s302
      %s305 = sphi 0, %s304
      %s319 = sphi 0, %s305
      %s323 = sphi 0, %s323
      %s325 = sphi 0, %s323
      %s326 = sphi 0, %s325
      %s340 = sphi 0, %s326
      %s344 = sphi 0, %s344
      %s346 = sphi 0, %s344
      %s347 = sphi 0, %s346
      %s361 = sphi 0, %s347
      %s365 = sphi 0, %s365
      %s367 = sphi 0, %s365
      %s368 = sphi 0, %s367
      %s382 = sphi 0, %s368
      %s386 = sphi 0, %s386
      %s388 = sphi 0, %s386
      %s389 = sphi 0, %s388
      %s403 = sphi 0, %s389
      %s407 = sphi 0, %s407
      %s409 = sphi 0, %s407
      %s410 = sphi 0, %s409
      %s424 = sphi 0, %s410
      %s430 = sphi 0, %s432
      %s433 = sphi 0, %s430
      %s434 = sphi 0, %s433
      %s450 = sphi 0, %s434
    $region4: #{tpu_custom_call.1} parent=1 // loop_header_branch
      %30 = sbr.rel (%p28) target = $region8
    $region5: #{tpu_custom_call.1} parent=1 // loop_body
      %s32 = ssub.s32 %s27, 1
      %s33 = ssub.s32 %s27, 2
      %s34 = sadd.s32 %s27, 1
      %s35 = ssub.s32 %s27, %s34
      %p36 = scmp.eq.s32.totalorder %s35, 0
      %s38 = sadd.s32 %s37, 1
      %s39 = scalar_select %p36, %s37, %s38
      %p42 = pneg %p36
      %p43 = scmp.eq.s32.totalorder %s27, 1
      %p44 = por %p42, %p43
      %p45 = scmp.ne.s32.totalorder %s37, %s40
      %p46 = scmp.eq.s32.totalorder %s27, 0
      %p47 = por %p45, %p46
      %p48 = scmp.ne.s32.totalorder %s37, %s40
      %p49 = scmp.eq.s32.totalorder %s32, 1
      %p50 = por %p48, %p49
      %p51 = scmp.ne.s32.totalorder %s40, %s41
      %p52 = scmp.eq.s32.totalorder %s32, 0
      %p53 = por %p51, %p52
      %p54 = scmp.ne.s32.totalorder %s40, %s41
      %p55 = scmp.eq.s32.totalorder %s33, 1
      %p56 = por %p54, %p55
      %p58 = scmp.ne.s32.totalorder %s41, %s57
      %p59 = scmp.eq.s32.totalorder %s33, 0
      %p60 = por %p58, %p59
      %s61 = ssub.s32 %s27, %s34
      %p62 = scmp.eq.s32.totalorder %s61, 0
      %s64 = sadd.s32 %s63, 1
      %s65 = scalar_select %p62, %s63, %s64
      %p68 = pneg %p62
      %p69 = scmp.eq.s32.totalorder %s27, 1
      %p70 = por %p68, %p69
      %p71 = scmp.ne.s32.totalorder %s63, %s66
      %p72 = scmp.eq.s32.totalorder %s27, 0
      %p73 = por %p71, %p72
      %p74 = scmp.ne.s32.totalorder %s63, %s66
      %p75 = scmp.eq.s32.totalorder %s32, 1
      %p76 = por %p74, %p75
      %p77 = scmp.ne.s32.totalorder %s66, %s67
      %p78 = scmp.eq.s32.totalorder %s32, 0
      %p79 = por %p77, %p78
      %p80 = scmp.ne.s32.totalorder %s66, %s67
      %p81 = scmp.eq.s32.totalorder %s33, 1
      %p82 = por %p80, %p81
      %p84 = scmp.ne.s32.totalorder %s67, %s83
      %p85 = scmp.eq.s32.totalorder %s33, 0
      %p86 = por %p84, %p85
      %s87 = ssub.s32 %s27, %s34
      %p88 = scmp.eq.s32.totalorder %s87, 0
      %s90 = sadd.s32 %s89, 1
      %s91 = scalar_select %p88, %s89, %s90
      %p94 = pneg %p88
      %p95 = scmp.eq.s32.totalorder %s27, 1
      %p96 = por %p94, %p95
      %p97 = scmp.ne.s32.totalorder %s89, %s92
      %p98 = scmp.eq.s32.totalorder %s27, 0
      %p99 = por %p97, %p98
      %p100 = scmp.ne.s32.totalorder %s89, %s92
      %p101 = scmp.eq.s32.totalorder %s32, 1
      %p102 = por %p100, %p101
      %p103 = scmp.ne.s32.totalorder %s92, %s93
      %p104 = scmp.eq.s32.totalorder %s32, 0
      %p105 = por %p103, %p104
      %p106 = scmp.ne.s32.totalorder %s92, %s93
      %p107 = scmp.eq.s32.totalorder %s33, 1
      %p108 = por %p106, %p107
      %p110 = scmp.ne.s32.totalorder %s93, %s109
      %p111 = scmp.eq.s32.totalorder %s33, 0
      %p112 = por %p110, %p111
      %s114 = sadd.s32 %s113, 1
      %p117 = scmp.eq.s32.totalorder %s27, 1
      %p118 = scmp.ne.s32.totalorder %s113, %s115
      %p119 = scmp.eq.s32.totalorder %s27, 0
      %p120 = por %p118, %p119
      %p121 = scmp.ne.s32.totalorder %s113, %s115
      %p122 = scmp.eq.s32.totalorder %s32, 1
      %p123 = por %p121, %p122
      %p124 = scmp.ne.s32.totalorder %s115, %s116
      %p125 = scmp.eq.s32.totalorder %s32, 0
      %p126 = por %p124, %p125
      %p127 = scmp.ne.s32.totalorder %s115, %s116
      %p128 = scmp.eq.s32.totalorder %s33, 1
      %p129 = por %p127, %p128
      %p131 = scmp.ne.s32.totalorder %s116, %s130
      %p132 = scmp.eq.s32.totalorder %s33, 0
      %p133 = por %p131, %p132
      %s135 = sadd.s32 %s134, 1
      %p138 = scmp.eq.s32.totalorder %s27, 1
      %p139 = scmp.ne.s32.totalorder %s134, %s136
      %p140 = scmp.eq.s32.totalorder %s27, 0
      %p141 = por %p139, %p140
      %p142 = scmp.ne.s32.totalorder %s134, %s136
      %p143 = scmp.eq.s32.totalorder %s32, 1
      %p144 = por %p142, %p143
      %p145 = scmp.ne.s32.totalorder %s136, %s137
      %p146 = scmp.eq.s32.totalorder %s32, 0
      %p147 = por %p145, %p146
      %p148 = scmp.ne.s32.totalorder %s136, %s137
      %p149 = scmp.eq.s32.totalorder %s33, 1
      %p150 = por %p148, %p149
      %p152 = scmp.ne.s32.totalorder %s137, %s151
      %p153 = scmp.eq.s32.totalorder %s33, 0
      %p154 = por %p152, %p153
      %s156 = sadd.s32 %s155, 1
      %p159 = scmp.eq.s32.totalorder %s27, 1
      %p160 = scmp.ne.s32.totalorder %s155, %s157
      %p161 = scmp.eq.s32.totalorder %s27, 0
      %p162 = por %p160, %p161
      %p163 = scmp.ne.s32.totalorder %s155, %s157
      %p164 = scmp.eq.s32.totalorder %s32, 1
      %p165 = por %p163, %p164
      %p166 = scmp.ne.s32.totalorder %s157, %s158
      %p167 = scmp.eq.s32.totalorder %s32, 0
      %p168 = por %p166, %p167
      %p169 = scmp.ne.s32.totalorder %s157, %s158
      %p170 = scmp.eq.s32.totalorder %s33, 1
      %p171 = por %p169, %p170
      %p173 = scmp.ne.s32.totalorder %s158, %s172
      %p174 = scmp.eq.s32.totalorder %s33, 0
      %p175 = por %p173, %p174
      %s177 = sadd.s32 %s176, 1
      %p180 = scmp.eq.s32.totalorder %s27, 1
      %p181 = scmp.ne.s32.totalorder %s176, %s178
      %p182 = scmp.eq.s32.totalorder %s27, 0
      %p183 = por %p181, %p182
      %p184 = scmp.ne.s32.totalorder %s176, %s178
      %p185 = scmp.eq.s32.totalorder %s32, 1
      %p186 = por %p184, %p185
      %p187 = scmp.ne.s32.totalorder %s178, %s179
      %p188 = scmp.eq.s32.totalorder %s32, 0
      %p189 = por %p187, %p188
      %p190 = scmp.ne.s32.totalorder %s178, %s179
      %p191 = scmp.eq.s32.totalorder %s33, 1
      %p192 = por %p190, %p191
      %p194 = scmp.ne.s32.totalorder %s179, %s193
      %p195 = scmp.eq.s32.totalorder %s33, 0
      %p196 = por %p194, %p195
      %s198 = sadd.s32 %s197, 1
      %p201 = scmp.eq.s32.totalorder %s27, 1
      %p202 = scmp.ne.s32.totalorder %s197, %s199
      %p203 = scmp.eq.s32.totalorder %s27, 0
      %p204 = por %p202, %p203
      %p205 = scmp.ne.s32.totalorder %s197, %s199
      %p206 = scmp.eq.s32.totalorder %s32, 1
      %p207 = por %p205, %p206
      %p208 = scmp.ne.s32.totalorder %s199, %s200
      %p209 = scmp.eq.s32.totalorder %s32, 0
      %p210 = por %p208, %p209
      %p211 = scmp.ne.s32.totalorder %s199, %s200
      %p212 = scmp.eq.s32.totalorder %s33, 1
      %p213 = por %p211, %p212
      %p215 = scmp.ne.s32.totalorder %s200, %s214
      %p216 = scmp.eq.s32.totalorder %s33, 0
      %p217 = por %p215, %p216
      %s219 = sadd.s32 %s218, 1
      %p222 = scmp.eq.s32.totalorder %s27, 1
      %p223 = scmp.ne.s32.totalorder %s218, %s220
      %p224 = scmp.eq.s32.totalorder %s27, 0
      %p225 = por %p223, %p224
      %p226 = scmp.ne.s32.totalorder %s218, %s220
      %p227 = scmp.eq.s32.totalorder %s32, 1
      %p228 = por %p226, %p227
      %p229 = scmp.ne.s32.totalorder %s220, %s221
      %p230 = scmp.eq.s32.totalorder %s32, 0
      %p231 = por %p229, %p230
      %p232 = scmp.ne.s32.totalorder %s220, %s221
      %p233 = scmp.eq.s32.totalorder %s33, 1
      %p234 = por %p232, %p233
      %p236 = scmp.ne.s32.totalorder %s221, %s235
      %p237 = scmp.eq.s32.totalorder %s33, 0
      %p238 = por %p236, %p237
      %s240 = sadd.s32 %s239, 1
      %p243 = scmp.eq.s32.totalorder %s27, 1
      %p244 = scmp.ne.s32.totalorder %s239, %s241
      %p245 = scmp.eq.s32.totalorder %s27, 0
      %p246 = por %p244, %p245
      %p247 = scmp.ne.s32.totalorder %s239, %s241
      %p248 = scmp.eq.s32.totalorder %s32, 1
      %p249 = por %p247, %p248
      %p250 = scmp.ne.s32.totalorder %s241, %s242
      %p251 = scmp.eq.s32.totalorder %s32, 0
      %p252 = por %p250, %p251
      %p253 = scmp.ne.s32.totalorder %s241, %s242
      %p254 = scmp.eq.s32.totalorder %s33, 1
      %p255 = por %p253, %p254
      %p257 = scmp.ne.s32.totalorder %s242, %s256
      %p258 = scmp.eq.s32.totalorder %s33, 0
      %p259 = por %p257, %p258
      %s261 = sadd.s32 %s260, 1
      %p264 = scmp.eq.s32.totalorder %s27, 1
      %p265 = scmp.ne.s32.totalorder %s260, %s262
      %p266 = scmp.eq.s32.totalorder %s27, 0
      %p267 = por %p265, %p266
      %p268 = scmp.ne.s32.totalorder %s260, %s262
      %p269 = scmp.eq.s32.totalorder %s32, 1
      %p270 = por %p268, %p269
      %p271 = scmp.ne.s32.totalorder %s262, %s263
      %p272 = scmp.eq.s32.totalorder %s32, 0
      %p273 = por %p271, %p272
      %p274 = scmp.ne.s32.totalorder %s262, %s263
      %p275 = scmp.eq.s32.totalorder %s33, 1
      %p276 = por %p274, %p275
      %p278 = scmp.ne.s32.totalorder %s263, %s277
      %p279 = scmp.eq.s32.totalorder %s33, 0
      %p280 = por %p278, %p279
      %s282 = sadd.s32 %s281, 1
      %p285 = scmp.eq.s32.totalorder %s27, 1
      %p286 = scmp.ne.s32.totalorder %s281, %s283
      %p287 = scmp.eq.s32.totalorder %s27, 0
      %p288 = por %p286, %p287
      %p289 = scmp.ne.s32.totalorder %s281, %s283
      %p290 = scmp.eq.s32.totalorder %s32, 1
      %p291 = por %p289, %p290
      %p292 = scmp.ne.s32.totalorder %s283, %s284
      %p293 = scmp.eq.s32.totalorder %s32, 0
      %p294 = por %p292, %p293
      %p295 = scmp.ne.s32.totalorder %s283, %s284
      %p296 = scmp.eq.s32.totalorder %s33, 1
      %p297 = por %p295, %p296
      %p299 = scmp.ne.s32.totalorder %s284, %s298
      %p300 = scmp.eq.s32.totalorder %s33, 0
      %p301 = por %p299, %p300
      %s303 = sadd.s32 %s302, 1
      %p306 = scmp.eq.s32.totalorder %s27, 1
      %p307 = scmp.ne.s32.totalorder %s302, %s304
      %p308 = scmp.eq.s32.totalorder %s27, 0
      %p309 = por %p307, %p308
      %p310 = scmp.ne.s32.totalorder %s302, %s304
      %p311 = scmp.eq.s32.totalorder %s32, 1
      %p312 = por %p310, %p311
      %p313 = scmp.ne.s32.totalorder %s304, %s305
      %p314 = scmp.eq.s32.totalorder %s32, 0
      %p315 = por %p313, %p314
      %p316 = scmp.ne.s32.totalorder %s304, %s305
      %p317 = scmp.eq.s32.totalorder %s33, 1
      %p318 = por %p316, %p317
      %p320 = scmp.ne.s32.totalorder %s305, %s319
      %p321 = scmp.eq.s32.totalorder %s33, 0
      %p322 = por %p320, %p321
      %s324 = sadd.s32 %s323, 1
      %p327 = scmp.eq.s32.totalorder %s27, 1
      %p328 = scmp.ne.s32.totalorder %s323, %s325
      %p329 = scmp.eq.s32.totalorder %s27, 0
      %p330 = por %p328, %p329
      %p331 = scmp.ne.s32.totalorder %s323, %s325
      %p332 = scmp.eq.s32.totalorder %s32, 1
      %p333 = por %p331, %p332
      %p334 = scmp.ne.s32.totalorder %s325, %s326
      %p335 = scmp.eq.s32.totalorder %s32, 0
      %p336 = por %p334, %p335
      %p337 = scmp.ne.s32.totalorder %s325, %s326
      %p338 = scmp.eq.s32.totalorder %s33, 1
      %p339 = por %p337, %p338
      %p341 = scmp.ne.s32.totalorder %s326, %s340
      %p342 = scmp.eq.s32.totalorder %s33, 0
      %p343 = por %p341, %p342
      %s345 = sadd.s32 %s344, 1
      %p348 = scmp.eq.s32.totalorder %s27, 1
      %p349 = scmp.ne.s32.totalorder %s344, %s346
      %p350 = scmp.eq.s32.totalorder %s27, 0
      %p351 = por %p349, %p350
      %p352 = scmp.ne.s32.totalorder %s344, %s346
      %p353 = scmp.eq.s32.totalorder %s32, 1
      %p354 = por %p352, %p353
      %p355 = scmp.ne.s32.totalorder %s346, %s347
      %p356 = scmp.eq.s32.totalorder %s32, 0
      %p357 = por %p355, %p356
      %p358 = scmp.ne.s32.totalorder %s346, %s347
      %p359 = scmp.eq.s32.totalorder %s33, 1
      %p360 = por %p358, %p359
      %p362 = scmp.ne.s32.totalorder %s347, %s361
      %p363 = scmp.eq.s32.totalorder %s33, 0
      %p364 = por %p362, %p363
      %s366 = sadd.s32 %s365, 1
      %p369 = scmp.eq.s32.totalorder %s27, 1
      %p370 = scmp.ne.s32.totalorder %s365, %s367
      %p371 = scmp.eq.s32.totalorder %s27, 0
      %p372 = por %p370, %p371
      %p373 = scmp.ne.s32.totalorder %s365, %s367
      %p374 = scmp.eq.s32.totalorder %s32, 1
      %p375 = por %p373, %p374
      %p376 = scmp.ne.s32.totalorder %s367, %s368
      %p377 = scmp.eq.s32.totalorder %s32, 0
      %p378 = por %p376, %p377
      %p379 = scmp.ne.s32.totalorder %s367, %s368
      %p380 = scmp.eq.s32.totalorder %s33, 1
      %p381 = por %p379, %p380
      %p383 = scmp.ne.s32.totalorder %s368, %s382
      %p384 = scmp.eq.s32.totalorder %s33, 0
      %p385 = por %p383, %p384
      %s387 = sadd.s32 %s386, 1
      %p390 = scmp.eq.s32.totalorder %s27, 1
      %p391 = scmp.ne.s32.totalorder %s386, %s388
      %p392 = scmp.eq.s32.totalorder %s27, 0
      %p393 = por %p391, %p392
      %p394 = scmp.ne.s32.totalorder %s386, %s388
      %p395 = scmp.eq.s32.totalorder %s32, 1
      %p396 = por %p394, %p395
      %p397 = scmp.ne.s32.totalorder %s388, %s389
      %p398 = scmp.eq.s32.totalorder %s32, 0
      %p399 = por %p397, %p398
      %p400 = scmp.ne.s32.totalorder %s388, %s389
      %p401 = scmp.eq.s32.totalorder %s33, 1
      %p402 = por %p400, %p401
      %p404 = scmp.ne.s32.totalorder %s389, %s403
      %p405 = scmp.eq.s32.totalorder %s33, 0
      %p406 = por %p404, %p405
      %s408 = sadd.s32 %s407, 1
      %p411 = scmp.eq.s32.totalorder %s27, 1
      %p412 = scmp.ne.s32.totalorder %s407, %s409
      %p413 = scmp.eq.s32.totalorder %s27, 0
      %p414 = por %p412, %p413
      %p415 = scmp.ne.s32.totalorder %s407, %s409
      %p416 = scmp.eq.s32.totalorder %s32, 1
      %p417 = por %p415, %p416
      %p418 = scmp.ne.s32.totalorder %s409, %s410
      %p419 = scmp.eq.s32.totalorder %s32, 0
      %p420 = por %p418, %p419
      %p421 = scmp.ne.s32.totalorder %s409, %s410
      %p422 = scmp.eq.s32.totalorder %s33, 1
      %p423 = por %p421, %p422
      %p425 = scmp.ne.s32.totalorder %s410, %s424
      %p426 = scmp.eq.s32.totalorder %s33, 0
      %p427 = por %p425, %p426
      %s428 = ssub.s32 %s27, %s34
      %p429 = scmp.eq.s32.totalorder %s428, 0
      %s431 = sadd.s32 %s430, 1
      %s432 = scalar_select %p429, %s430, %s431
      %p435 = pneg %p429
      %p436 = scmp.eq.s32.totalorder %s27, 1
      %p437 = por %p435, %p436
      %p438 = scmp.ne.s32.totalorder %s430, %s433
      %p439 = scmp.eq.s32.totalorder %s27, 0
      %p440 = por %p438, %p439
      %p441 = scmp.ne.s32.totalorder %s430, %s433
      %p442 = scmp.eq.s32.totalorder %s32, 1
      %p443 = por %p441, %p442
      %p444 = scmp.ne.s32.totalorder %s433, %s434
      %p445 = scmp.eq.s32.totalorder %s32, 0
      %p446 = por %p444, %p445
      %p447 = scmp.ne.s32.totalorder %s433, %s434
      %p448 = scmp.eq.s32.totalorder %s33, 1
      %p449 = por %p447, %p448
      %p451 = scmp.ne.s32.totalorder %s434, %s450
      %p452 = scmp.eq.s32.totalorder %s33, 0
      %p453 = por %p451, %p452
      %p454 = scmp.le.s32.totalorder 1, %s27
      %p455 = scmp.lt.s32.totalorder %s27, 3
      %p456 = pnand %p454, %p455
      %p457 = pneg %p456
      // Predicated region
      $region9: #{tpu_custom_call.1} parent=5 // pred_check
        _
      $region10: #{tpu_custom_call.1} parent=5 // pred_check_branch
        %459 = sbr.rel (%p456) target = $region12
      $region11: #{tpu_custom_call.1} parent=5 // pred_region
        %s460 = ssub.s32 %s27, 1
        // Predicated region
        $region13: #{tpu_custom_call.1} parent=11 // pred_check
          %p461 = pneg %p126
        $region14: #{tpu_custom_call.1} parent=11 // pred_check_branch
          %463 = sbr.rel (%p461) target = $region16
        $region15: #{tpu_custom_call.1} parent=11 // pred_region
          _
        $region16: #{tpu_custom_call.1} parent=11 // pred_fallthru
          _
        // Predicated region
        $region17: #{tpu_custom_call.1} parent=11 // pred_check
          %p464 = pneg %p147
        $region18: #{tpu_custom_call.1} parent=11 // pred_check_branch
          %466 = sbr.rel (%p464) target = $region20
        $region19: #{tpu_custom_call.1} parent=11 // pred_region
          _
        $region20: #{tpu_custom_call.1} parent=11 // pred_fallthru
          _
        // Predicated region
        $region21: #{tpu_custom_call.1} parent=11 // pred_check
          %p467 = pneg %p168
        $region22: #{tpu_custom_call.1} parent=11 // pred_check_branch
          %469 = sbr.rel (%p467) target = $region24
        $region23: #{tpu_custom_call.1} parent=11 // pred_region
          _
        $region24: #{tpu_custom_call.1} parent=11 // pred_fallthru
          _
        // Predicated region
        $region25: #{tpu_custom_call.1} parent=11 // pred_check
          %p470 = pneg %p189
        $region26: #{tpu_custom_call.1} parent=11 // pred_check_branch
          %472 = sbr.rel (%p470) target = $region28
        $region27: #{tpu_custom_call.1} parent=11 // pred_region
          _
        $region28: #{tpu_custom_call.1} parent=11 // pred_fallthru
          _
        // Predicated region
        $region29: #{tpu_custom_call.1} parent=11 // pred_check
          %p473 = pneg %p210
        $region30: #{tpu_custom_call.1} parent=11 // pred_check_branch
          %475 = sbr.rel (%p473) target = $region32
        $region31: #{tpu_custom_call.1} parent=11 // pred_region
          _
        $region32: #{tpu_custom_call.1} parent=11 // pred_fallthru
          _
        // Predicated region
        $region33: #{tpu_custom_call.1} parent=11 // pred_check
          %p476 = pneg %p231
        $region34: #{tpu_custom_call.1} parent=11 // pred_check_branch
          %478 = sbr.rel (%p476) target = $region36
        $region35: #{tpu_custom_call.1} parent=11 // pred_region
          _
        $region36: #{tpu_custom_call.1} parent=11 // pred_fallthru
          _
        // Predicated region
        $region37: #{tpu_custom_call.1} parent=11 // pred_check
          %p479 = pneg %p252
        $region38: #{tpu_custom_call.1} parent=11 // pred_check_branch
          %481 = sbr.rel (%p479) target = $region40
        $region39: #{tpu_custom_call.1} parent=11 // pred_region
          _
        $region40: #{tpu_custom_call.1} parent=11 // pred_fallthru
          _
        // Predicated region
        $region41: #{tpu_custom_call.1} parent=11 // pred_check
          %p482 = pneg %p273
        $region42: #{tpu_custom_call.1} parent=11 // pred_check_branch
          %484 = sbr.rel (%p482) target = $region44
        $region43: #{tpu_custom_call.1} parent=11 // pred_region
          _
        $region44: #{tpu_custom_call.1} parent=11 // pred_fallthru
          _
        // Predicated region
        $region45: #{tpu_custom_call.1} parent=11 // pred_check
          %p485 = pneg %p294
        $region46: #{tpu_custom_call.1} parent=11 // pred_check_branch
          %487 = sbr.rel (%p485) target = $region48
        $region47: #{tpu_custom_call.1} parent=11 // pred_region
          _
        $region48: #{tpu_custom_call.1} parent=11 // pred_fallthru
          _
        // Predicated region
        $region49: #{tpu_custom_call.1} parent=11 // pred_check
          %p488 = pneg %p315
        $region50: #{tpu_custom_call.1} parent=11 // pred_check_branch
          %490 = sbr.rel (%p488) target = $region52
        $region51: #{tpu_custom_call.1} parent=11 // pred_region
          _
        $region52: #{tpu_custom_call.1} parent=11 // pred_fallthru
          _
        // Predicated region
        $region53: #{tpu_custom_call.1} parent=11 // pred_check
          %p491 = pneg %p336
        $region54: #{tpu_custom_call.1} parent=11 // pred_check_branch
          %493 = sbr.rel (%p491) target = $region56
        $region55: #{tpu_custom_call.1} parent=11 // pred_region
          _
        $region56: #{tpu_custom_call.1} parent=11 // pred_fallthru
          _
        // Predicated region
        $region57: #{tpu_custom_call.1} parent=11 // pred_check
          %p494 = pneg %p357
        $region58: #{tpu_custom_call.1} parent=11 // pred_check_branch
          %496 = sbr.rel (%p494) target = $region60
        $region59: #{tpu_custom_call.1} parent=11 // pred_region
          _
        $region60: #{tpu_custom_call.1} parent=11 // pred_fallthru
          _
        // Predicated region
        $region61: #{tpu_custom_call.1} parent=11 // pred_check
          %p497 = pneg %p378
        $region62: #{tpu_custom_call.1} parent=11 // pred_check_branch
          %499 = sbr.rel (%p497) target = $region64
        $region63: #{tpu_custom_call.1} parent=11 // pred_region
          _
        $region64: #{tpu_custom_call.1} parent=11 // pred_fallthru
          _
        // Predicated region
        $region65: #{tpu_custom_call.1} parent=11 // pred_check
          %p500 = pneg %p399
        $region66: #{tpu_custom_call.1} parent=11 // pred_check_branch
          %502 = sbr.rel (%p500) target = $region68
        $region67: #{tpu_custom_call.1} parent=11 // pred_region
          _
        $region68: #{tpu_custom_call.1} parent=11 // pred_fallthru
          _
        // Predicated region
        $region69: #{tpu_custom_call.1} parent=11 // pred_check
          %p503 = pneg %p420
        $region70: #{tpu_custom_call.1} parent=11 // pred_check_branch
          %505 = sbr.rel (%p503) target = $region72
        $region71: #{tpu_custom_call.1} parent=11 // pred_region
          _
        $region72: #{tpu_custom_call.1} parent=11 // pred_fallthru
          _
      $region12: #{tpu_custom_call.1} parent=5 // pred_fallthru
        _
      %p506 = scmp.lt.s32.totalorder %s27, 2
      // Predicated region
      $region73: #{tpu_custom_call.1} parent=5 // pred_check
        %p507 = pneg %p506
      $region74: #{tpu_custom_call.1} parent=5 // pred_check_branch
        %509 = sbr.rel (%p507) target = $region76
      $region75: #{tpu_custom_call.1} parent=5 // pred_region
        // Predicated region
        $region77: #{tpu_custom_call.1} parent=75 // pred_check
          %p510 = pneg %p47
        $region78: #{tpu_custom_call.1} parent=75 // pred_check_branch
          %512 = sbr.rel (%p510) target = $region80
        $region79: #{tpu_custom_call.1} parent=75 // pred_region
          %p513 = scmp.lt.s32.totalorder %s27, 1
          %s514 = scalar_select %p513, %s27, 1
          %s515 = smul.addr %s514, 8
          %s516 = scalar_lea.vmem %s0, %s515
        $region80: #{tpu_custom_call.1} parent=75 // pred_fallthru
          _
        // Predicated region
        $region81: #{tpu_custom_call.1} parent=75 // pred_check
          %p517 = pneg %p73
        $region82: #{tpu_custom_call.1} parent=75 // pred_check_branch
          %519 = sbr.rel (%p517) target = $region84
        $region83: #{tpu_custom_call.1} parent=75 // pred_region
          %p520 = scmp.lt.s32.totalorder %s27, 1
          %s521 = scalar_select %p520, %s27, 1
          %s522 = smul.addr %s521, 8
          %s523 = scalar_lea.vmem %s1, %s522
        $region84: #{tpu_custom_call.1} parent=75 // pred_fallthru
          _
        // Predicated region
        $region85: #{tpu_custom_call.1} parent=75 // pred_check
          %p524 = pneg %p99
        $region86: #{tpu_custom_call.1} parent=75 // pred_check_branch
          %526 = sbr.rel (%p524) target = $region88
        $region87: #{tpu_custom_call.1} parent=75 // pred_region
          %p527 = scmp.lt.s32.totalorder %s27, 1
          %s528 = scalar_select %p527, %s27, 1
          %s529 = scalar_lea.vmem %s2, %s528
        $region88: #{tpu_custom_call.1} parent=75 // pred_fallthru
          _
      $region76: #{tpu_custom_call.1} parent=5 // pred_fallthru
        _
      %p530 = scmp.le.s32.totalorder 1, %s27
      %p531 = scmp.lt.s32.totalorder %s27, 3
      %p532 = pnand %p530, %p531
      %p533 = pneg %p532
      // Predicated region
      $region89: #{tpu_custom_call.1} parent=5 // pred_check
        _
      $region90: #{tpu_custom_call.1} parent=5 // pred_check_branch
        %535 = sbr.rel (%p532) target = $region92
      $region91: #{tpu_custom_call.1} parent=5 // pred_region
        %s536 = ssub.s32 %s27, 1
        %p537 = scmp.lt.s32.totalorder %s32, 1
        %s538 = scalar_select %p537, %s32, 1
        %s539 = smul.addr %s538, 8
        %s540 = scalar_lea.vmem %s0, %s539
        %p541 = pneg %p53
        %p542 = pneg %p50
        %p543 = scmp.lt.s32.totalorder %s32, 1
        %s544 = scalar_select %p543, %s32, 1
        %s545 = smul.addr %s544, 8
        %s546 = scalar_lea.vmem %s1, %s545
        %p547 = pneg %p79
        %p548 = pneg %p76
        %p549 = scmp.lt.s32.totalorder %s32, 1
        %s550 = scalar_select %p549, %s32, 1
        %s551 = scalar_lea.vmem %s2, %s550
        %p552 = pneg %p105
        %p553 = pneg %p102
        %p554 = pneg %p126
        %p555 = pneg %p123
        %p556 = pneg %p147
        %p557 = pneg %p144
        %p558 = pneg %p168
        %p559 = pneg %p165
        %p560 = pneg %p189
        %p561 = pneg %p186
        %p562 = pneg %p210
        %p563 = pneg %p207
        %p564 = pneg %p231
        %p565 = pneg %p228
        %p566 = pneg %p252
        %p567 = pneg %p249
        %p568 = pneg %p273
        %p569 = pneg %p270
        %p570 = pneg %p294
        %p571 = pneg %p291
        %p572 = pneg %p315
        %p573 = pneg %p312
        %p574 = pneg %p336
        %p575 = pneg %p333
        %p576 = pneg %p357
        %p577 = pneg %p354
        %p578 = pneg %p378
        %p579 = pneg %p375
        %p580 = pneg %p399
        %p581 = pneg %p396
        %p582 = pneg %p420
        %p583 = pneg %p417
        %p584 = pneg %p446
        %p585 = pneg %p443
        %s586 = sand.u32 %s433, 1
        %s587 = scalar_lea.sflag [#allocation5], %s586
        %s588 = sand.u32 %s433, 1
        %s589 = smul.addr %s588, 8
        %s590 = scalar_lea.vmem [#allocation4], %s589
        %p591 = scmp.lt.s32.totalorder %s32, 1
        %s592 = scalar_select %p591, %s32, 1
        %s593 = smul.addr %s592, 8
        %s594 = scalar_lea.vmem %s0, %s593
        %p595 = scmp.lt.s32.totalorder %s32, 1
        %s596 = scalar_select %p595, %s32, 1
        %s597 = smul.addr %s596, 8
        %s598 = scalar_lea.vmem %s1, %s597
        %p599 = scmp.lt.s32.totalorder %s32, 1
        %s600 = scalar_select %p599, %s32, 1
        %s601 = scalar_lea.vmem %s2, %s600
        %v603 = vld [vmem:[%s4] sm:$0x1]
        %v604 = vld [vmem:[%s5] sm:$0x1]
        %v605 = vld [vmem:[%s598] sm:$0xff]
        %v606 = vld [vmem:[%s601] sm:$0x1]
        %v607 = vld [vmem:[%s594] sm:$0xff]
        %v608 = vld [vmem:[%s3] sm:$0xff]
        %v609 = vadd.f32 %v607, %v608
        %vm610 = vcmask 261120
        %v611 = vsel %vm610, %v609, 0.0
        %612 = vadd.xlane.f32.xlu0 %v611
        %v613 = vpop.xlane.xlu0 %612
        %v614 = vrcp.pop 32.0
        %v615 = vmul.f32 32.0, %v614
        %v616 = vsub.f32 1.0, %v615
        %v617 = vmul.f32 %v614, %v616
        %v618 = vadd.f32 %v614, %v617
        %vm619 = vweird.f32 %v614
        %v620 = vsel %vm619, %v614, %v618
        %v621 = vmul.f32 %v613, %v620
        %v622 = vsub.f32 %v609, %v621
        %v623 = vmul.f32 %v622, %v622
        %v624 = vsel %vm610, %v623, 0.0
        %625 = vadd.xlane.f32.xlu0 %v624
        %v626 = vpop.xlane.xlu0 %625
        %v627 = vmul.f32 %v626, %v620
        %v628 = vadd.f32 %v627, 1e-05
        %v629 = vrsqrt.pop %v628
        %v630 = vmul.f32 %v629, %v628
        %v631 = vmul.f32 %v630, %v629
        %v632 = vmul.f32 0.5, %v631
        %v633 = vsub.f32 1.5, %v632
        %v634 = vmul.f32 %v629, %v633
        %vm635 = vweird.f32 %v628
        %vm636 = vweird.f32 %v629
        %vm637 = vmor %vm635, %vm636
        %v638 = vsel %vm637, %v629, %v634
        %v639 = vmul.f32 %v622, %v638
        %v641 = vperm.slane %v603, 0
        %v643 = vmul.f32 %v639, %v641
        %v645 = vperm.slane %v604, 0
        %v647 = vadd.f32 %v643, %v645
        %vm648 = vcmask 256000
        %649 = vst.msk [vmem:[#allocation2] sm:$0x7] %vm648, 0.0
        %650 = vst.msk [vmem:[#allocation2 + $0xb] sm:$0x7] %vm648, 0.0
        %651 = vst.msk [vmem:[#allocation2 + $0x3] sm:$0xff] %vm610, %v647
        %v652 = vld [vmem:[#allocation2] sm:$0xff]
        %v653 = vld [vmem:[%s6] sm:$0x1]
        %v654 = vperm.slane %v653, 0
        %v655 = vmul.f32 %v652, %v654
        %v656 = vadd.f32 %v655, 0.0
        %v657 = vld [vmem:[#allocation2 + $0x1] sm:$0xff]
        %v658 = vld [vmem:[%s6 + $0x1] sm:$0x1]
        %v659 = vperm.slane %v658, 0
        %v660 = vmul.f32 %v657, %v659
        %v661 = vadd.f32 %v656, %v660
        %v662 = vld [vmem:[#allocation2 + $0x2] sm:$0xff]
        %v663 = vld [vmem:[%s6 + $0x2] sm:$0x1]
        %v664 = vperm.slane %v663, 0
        %v665 = vmul.f32 %v662, %v664
        %v666 = vadd.f32 %v661, %v665
        %v667 = vld [vmem:[#allocation2 + $0x3] sm:$0xff]
        %v668 = vld [vmem:[%s6 + $0x3] sm:$0x1]
        %v669 = vperm.slane %v668, 0
        %v670 = vmul.f32 %v667, %v669
        %v671 = vadd.f32 %v666, %v670
        %v672 = vld [vmem:[#allocation2 + $0x4] sm:$0xff]
        %v673 = vld [vmem:[%s6 + $0x4] sm:$0x1]
        %v674 = vperm.slane %v673, 0
        %v675 = vmul.f32 %v672, %v674
        %v676 = vadd.f32 %v671, %v675
        %v677 = vld [vmem:[#allocation2 + $0x5] sm:$0xff]
        %v678 = vld [vmem:[%s6 + $0x5] sm:$0x1]
        %v679 = vperm.slane %v678, 0
        %v680 = vmul.f32 %v677, %v679
        %v681 = vadd.f32 %v676, %v680
        %v682 = vld [vmem:[#allocation2 + $0x6] sm:$0xff]
        %v683 = vld [vmem:[%s6 + $0x6] sm:$0x1]
        %v684 = vperm.slane %v683, 0
        %v685 = vmul.f32 %v682, %v684
        %v686 = vadd.f32 %v681, %v685
        %v687 = vld [vmem:[%s7] sm:$0x1]
        %v689 = vperm.slane %v687, 0
        %v691 = vadd.f32 %v686, %v689
        %v692 = vmax.f32 %v691, 0.0
        %v693 = vpack.c.bf16 %v692, %v692
        %v694 = vld [vmem:[%s8] sm:$0xf]
        %v695 = vld [vmem:[%s8 + $0x4] sm:$0xf]
        %v696 = vld [vmem:[%s8 + $0x8] sm:$0xf]
        %v697 = vld [vmem:[%s8 + $0xc] sm:$0xf]
        %v698 = vld [vmem:[%s9] sm:$0x1]
        %v700 = vperm.slane %v698, 0
        %v706 = vunpack.c.l.b16 %v694
        %v707 = vunpack.c.l.b16 %v695
        %v708 = vunpack.c.l.b16 %v696
        %v709 = vunpack.c.l.b16 %v697
        %v710 = vpack.c.b16 %v707, %v706
        %v711 = vpack.c.b16 %v709, %v708
        %v715 = vsel %vm610, %v693, 0
        %717 = vmatpush.bf16.msra.mxu0 0
        %718 = vmatpush.bf16.msra.mxu0 0
        %719 = vmatpush.bf16.msra.mxu0 0
        %720 = vmatpush.bf16.msra.mxu0 0
        %721 = vmatpush.bf16.msra.mxu0 0
        %722 = vmatpush.bf16.msra.mxu0 0
        %723 = vmatpush.bf16.msra.mxu0 %v711
        %724 = vmatpush.bf16.msra.mxu0 %v710
        %725 = vmatmul.bf16.gmra.mxu0 %v715
        %v726 = vpop.f32.mrf.mxu0
        %v727 = vadd.f32 %v700, %v726
        %v728 = vpop.f32.mrf.mxu0
        %729 = vdwg.mxu0
        %v730 = vadd.f32 %v727, %v609
        %v731 = vsel %vm610, %v730, 0.0
        %732 = vadd.xlane.f32.xlu0 %v731
        %v733 = vpop.xlane.xlu0 %732
        %v734 = vmul.f32 %v733, %v620
        %v735 = vsub.f32 %v730, %v734
        %v736 = vmul.f32 %v735, %v735
        %v737 = vsel %vm610, %v736, 0.0
        %738 = vadd.xlane.f32.xlu0 %v737
        %v739 = vpop.xlane.xlu0 %738
        %v740 = vmul.f32 %v739, %v620
        %v741 = vadd.f32 %v740, 1e-05
        %v742 = vrsqrt.pop %v741
        %v743 = vmul.f32 %v742, %v741
        %v744 = vmul.f32 %v743, %v742
        %v745 = vmul.f32 0.5, %v744
        %v746 = vsub.f32 1.5, %v745
        %v747 = vmul.f32 %v742, %v746
        %vm748 = vweird.f32 %v741
        %vm749 = vweird.f32 %v742
        %vm750 = vmor %vm748, %vm749
        %v751 = vsel %vm750, %v742, %v747
        %v752 = vmul.f32 %v735, %v751
        %v753 = vmul.f32 %v752, %v641
        %v754 = vadd.f32 %v753, %v645
        %v755 = vpack.c.bf16 %v754, %v754
        %v756 = vld [vmem:[%s10] sm:$0xff]
        %v757 = vld [vmem:[%s10 + $0x8] sm:$0xff]
        %v758 = vld [vmem:[%s10 + $0x10] sm:$0xff]
        %v759 = vld [vmem:[%s10 + $0x18] sm:$0xff]
        %v760 = vld [vmem:[%s10 + $0x20] sm:$0xff]
        %v761 = vld [vmem:[%s10 + $0x28] sm:$0xff]
        %v762 = vld [vmem:[%s10 + $0x30] sm:$0xff]
        %v763 = vld [vmem:[%s10 + $0x38] sm:$0xff]
        %v764 = vld [vmem:[%s10 + $0x40] sm:$0xff]
        %v765 = vld [vmem:[%s10 + $0x48] sm:$0xff]
        %v766 = vld [vmem:[%s10 + $0x50] sm:$0xff]
        %v767 = vld [vmem:[%s10 + $0x58] sm:$0xff]
        %v768 = vld [vmem:[%s11] sm:$0x3f]
        %v770 = vperm.slane %v768, 0
        %v771 = vperm.slane %v768, 1
        %v772 = vperm.slane %v768, 2
        %v773 = vperm.slane %v768, 3
        %v774 = vperm.slane %v768, 4
        %v775 = vperm.slane %v768, 5
        %v794 = vunpack.c.l.b16 %v756
        %v795 = vunpack.c.h.b16 %v756
        %v796 = vunpack.c.l.b16 %v757
        %v797 = vunpack.c.h.b16 %v757
        %v798 = vunpack.c.l.b16 %v758
        %v799 = vunpack.c.h.b16 %v758
        %v800 = vunpack.c.l.b16 %v759
        %v801 = vunpack.c.h.b16 %v759
        %v802 = vunpack.c.l.b16 %v760
        %v803 = vunpack.c.h.b16 %v760
        %v804 = vunpack.c.l.b16 %v761
        %v805 = vunpack.c.h.b16 %v761
        %v806 = vunpack.c.l.b16 %v762
        %v807 = vunpack.c.h.b16 %v762
        %v808 = vunpack.c.l.b16 %v763
        %v809 = vunpack.c.h.b16 %v763
        %v810 = vunpack.c.l.b16 %v764
        %v811 = vunpack.c.h.b16 %v764
        %v812 = vunpack.c.l.b16 %v765
        %v813 = vunpack.c.h.b16 %v765
        %v814 = vunpack.c.l.b16 %v766
        %v815 = vunpack.c.h.b16 %v766
        %v816 = vunpack.c.l.b16 %v767
        %v817 = vunpack.c.h.b16 %v767
        %v818 = vpack.c.b16 %v800, %v794
        %v819 = vpack.c.b16 %v801, %v795
        %v820 = vpack.c.b16 %v802, %v796
        %v821 = vpack.c.b16 %v803, %v797
        %v822 = vpack.c.b16 %v804, %v798
        %v823 = vpack.c.b16 %v805, %v799
        %v824 = vpack.c.b16 %v812, %v806
        %v825 = vpack.c.b16 %v813, %v807
        %v826 = vpack.c.b16 %v814, %v808
        %v827 = vpack.c.b16 %v815, %v809
        %v828 = vpack.c.b16 %v816, %v810
        %v829 = vpack.c.b16 %v817, %v811
        %v843 = vsel %vm610, %v755, 0
        %845 = vmatpush.bf16.msra.mxu0 0
        %846 = vmatpush.bf16.msra.mxu0 0
        %847 = vmatpush.bf16.msra.mxu0 0
        %848 = vmatpush.bf16.msra.mxu0 0
        %849 = vmatpush.bf16.msra.mxu0 0
        %850 = vmatpush.bf16.msra.mxu0 0
        %851 = vmatpush.bf16.msra.mxu0 %v824
        %852 = vmatpush.bf16.msra.mxu0 %v818
        %853 = vmatmul.bf16.gmra.mxu0 %v843
        %v854 = vpop.f32.mrf.mxu0
        %v855 = vadd.f32 %v770, %v854
        %v856 = vpop.f32.mrf.mxu0
        %857 = vdwg.mxu0
        %858 = vmatpush.bf16.msra.mxu0 0
        %859 = vmatpush.bf16.msra.mxu0 0
        %860 = vmatpush.bf16.msra.mxu0 0
        %861 = vmatpush.bf16.msra.mxu0 0
        %862 = vmatpush.bf16.msra.mxu0 0
        %863 = vmatpush.bf16.msra.mxu0 0
        %864 = vmatpush.bf16.msra.mxu0 %v825
        %865 = vmatpush.bf16.msra.mxu0 %v819
        %866 = vmatmul.bf16.gmra.mxu0 %v843
        %v867 = vpop.f32.mrf.mxu0
        %v868 = vadd.f32 %v771, %v867
        %v869 = vpop.f32.mrf.mxu0
        %870 = vdwg.mxu0
        %871 = vmatpush.bf16.msra.mxu0 0
        %872 = vmatpush.bf16.msra.mxu0 0
        %873 = vmatpush.bf16.msra.mxu0 0
        %874 = vmatpush.bf16.msra.mxu0 0
        %875 = vmatpush.bf16.msra.mxu0 0
        %876 = vmatpush.bf16.msra.mxu0 0
        %877 = vmatpush.bf16.msra.mxu0 %v826
        %878 = vmatpush.bf16.msra.mxu0 %v820
        %879 = vmatmul.bf16.gmra.mxu0 %v843
        %v880 = vpop.f32.mrf.mxu0
        %v881 = vadd.f32 %v772, %v880
        %v882 = vpop.f32.mrf.mxu0
        %883 = vdwg.mxu0
        %884 = vmatpush.bf16.msra.mxu0 0
        %885 = vmatpush.bf16.msra.mxu0 0
        %886 = vmatpush.bf16.msra.mxu0 0
        %887 = vmatpush.bf16.msra.mxu0 0
        %888 = vmatpush.bf16.msra.mxu0 0
        %889 = vmatpush.bf16.msra.mxu0 0
        %890 = vmatpush.bf16.msra.mxu0 %v827
        %891 = vmatpush.bf16.msra.mxu0 %v821
        %892 = vmatmul.bf16.gmra.mxu0 %v843
        %v893 = vpop.f32.mrf.mxu0
        %v894 = vadd.f32 %v773, %v893
        %v895 = vpop.f32.mrf.mxu0
        %896 = vdwg.mxu0
        %897 = vmatpush.bf16.msra.mxu0 0
        %898 = vmatpush.bf16.msra.mxu0 0
        %899 = vmatpush.bf16.msra.mxu0 0
        %900 = vmatpush.bf16.msra.mxu0 0
        %901 = vmatpush.bf16.msra.mxu0 0
        %902 = vmatpush.bf16.msra.mxu0 0
        %903 = vmatpush.bf16.msra.mxu0 %v828
        %904 = vmatpush.bf16.msra.mxu0 %v822
        %905 = vmatmul.bf16.gmra.mxu0 %v843
        %v906 = vpop.f32.mrf.mxu0
        %v907 = vadd.f32 %v774, %v906
        %v908 = vpop.f32.mrf.mxu0
        %909 = vdwg.mxu0
        %910 = vmatpush.bf16.msra.mxu0 0
        %911 = vmatpush.bf16.msra.mxu0 0
        %912 = vmatpush.bf16.msra.mxu0 0
        %913 = vmatpush.bf16.msra.mxu0 0
        %914 = vmatpush.bf16.msra.mxu0 0
        %915 = vmatpush.bf16.msra.mxu0 0
        %916 = vmatpush.bf16.msra.mxu0 %v829
        %917 = vmatpush.bf16.msra.mxu0 %v823
        %918 = vmatmul.bf16.gmra.mxu0 %v843
        %v919 = vpop.f32.mrf.mxu0
        %v920 = vadd.f32 %v775, %v919
        %v921 = vpop.f32.mrf.mxu0
        %922 = vdwg.mxu0
        %924 = vset.pattern.permute.xlu0 0
        %925 = vperm.xlu0 %924, %v605
        %v926 = vpop.permute.xlu0 %925
        %v929 = vperm.slane %v606, 0
        %v931 = vmul.f32 %v926, %v929
        %v932 = vsub.f32 1.0, %v931
        %v933 = vmul.f32 %v932, -10000000.0
        %v934 = vpack.c.bf16 %v855, %v855
        %v935 = vpack.c.bf16 %v881, %v881
        %v936 = vpack.c.bf16 %v907, %v907
        %v938 = vsel %vm610, %v934, 0
        %v941 = vsel %vm610, %v935, 0
        %943 = vmatpush.bf16.xpose.msra.mxu0 0
        %944 = vmatpush.bf16.xpose.msra.mxu0 0
        %945 = vmatpush.bf16.xpose.msra.mxu0 0
        %946 = vmatpush.bf16.xpose.msra.mxu0 0
        %947 = vmatpush.bf16.xpose.msra.mxu0 0
        %948 = vmatpush.bf16.xpose.msra.mxu0 0
        %949 = vmatpush.bf16.xpose.msra.mxu0 0
        %950 = vmatpush.bf16.xpose.msra.mxu0 %v941
        %951 = vmatmul.bf16.gmra.mxu0 %v938
        %v952 = vpop.f32.mrf.mxu0
        %v953 = vadd.f32 0.0, %v952
        %v954 = vpop.f32.mrf.mxu0
        %955 = vdwg.mxu0
        %v956 = vmul.f32 %v953, 0.17677669
        %v957 = vmul.f32 %v956, %v931
        %v958 = vadd.f32 %v957, %v933
        %vm959 = vcmask 64512
        %v960 = vsel %vm959, %v958, -inf
        %961 = vmax.xlane.f32.xlu0 %v960
        %v962 = vpop.xlane.xlu0 %961
        %v963 = vsub.f32 %v958, %v962
        %v964 = vmul.f32 %v963, 1.442695
        %v965 = vpow.pop %v964
        %v966 = vsel %vm959, %v965, 0.0
        %967 = vadd.xlane.f32.xlu0 %v966
        %v968 = vpop.xlane.xlu0 %967
        %v969 = vrcp.pop %v968
        %v970 = vmul.f32 %v965, %v969
        %v971 = vmul.f32 %v970, %v931
        %v972 = vpack.c.bf16 %v971, %v971
        %v974 = vsel %vm959, %v972, 0
        %vm976 = vcmask 1043456
        %v978 = vsel %vm976, %v936, 0
        %980 = vmatpush.bf16.msra.mxu0 0
        %981 = vmatpush.bf16.msra.mxu0 0
        %982 = vmatpush.bf16.msra.mxu0 0
        %983 = vmatpush.bf16.msra.mxu0 0
        %984 = vmatpush.bf16.msra.mxu0 0
        %985 = vmatpush.bf16.msra.mxu0 0
        %986 = vmatpush.bf16.msra.mxu0 0
        %987 = vmatpush.bf16.msra.mxu0 %v978
        %988 = vmatmul.bf16.gmra.mxu0 %v974
        %v989 = vpop.f32.mrf.mxu0
        %v990 = vadd.f32 0.0, %v989
        %v991 = vpop.f32.mrf.mxu0
        %992 = vdwg.mxu0
        %993 = vst.msk [vmem:[#allocation3] sm:$0xff] %vm610, %v990
        %995 = vrot.lane.b32.xlu0 %v934, 96
        %v996 = vpop.permute.xlu0 %995
        %998 = vrot.lane.b32.xlu0 %v935, 96
        %v999 = vpop.permute.xlu0 %998
        %v1001 = vsel %vm610, %v996, 0
        %v1004 = vsel %vm610, %v999, 0
        %1006 = vmatpush.bf16.xpose.msra.mxu0 0
        %1007 = vmatpush.bf16.xpose.msra.mxu0 0
        %1008 = vmatpush.bf16.xpose.msra.mxu0 0
        %1009 = vmatpush.bf16.xpose.msra.mxu0 0
        %1010 = vmatpush.bf16.xpose.msra.mxu0 0
        %1011 = vmatpush.bf16.xpose.msra.mxu0 0
        %1012 = vmatpush.bf16.xpose.msra.mxu0 0
        %1013 = vmatpush.bf16.xpose.msra.mxu0 %v1004
        %1014 = vmatmul.bf16.gmra.mxu0 %v1001
        %v1015 = vpop.f32.mrf.mxu0
        %v1016 = vadd.f32 0.0, %v1015
        %v1017 = vpop.f32.mrf.mxu0
        %1018 = vdwg.mxu0
        %v1019 = vmul.f32 %v1016, 0.17677669
        %v1020 = vmul.f32 %v1019, %v931
        %v1021 = vadd.f32 %v1020, %v933
        %v1022 = vsel %vm959, %v1021, -inf
        %1023 = vmax.xlane.f32.xlu0 %v1022
        %v1024 = vpop.xlane.xlu0 %1023
        %v1025 = vsub.f32 %v1021, %v1024
        %v1026 = vmul.f32 %v1025, 1.442695
        %v1027 = vpow.pop %v1026
        %v1028 = vsel %vm959, %v1027, 0.0
        %1029 = vadd.xlane.f32.xlu0 %v1028
        %v1030 = vpop.xlane.xlu0 %1029
        %v1031 = vrcp.pop %v1030
        %v1032 = vmul.f32 %v1027, %v1031
        %v1033 = vmul.f32 %v1032, %v931
        %v1034 = vpack.c.bf16 %v1033, %v1033
        %1036 = vrot.lane.b32.xlu0 %v936, 96
        %v1037 = vpop.permute.xlu0 %1036
        %v1039 = vsel %vm959, %v1034, 0
        %v1042 = vsel %vm976, %v1037, 0
        %1044 = vmatpush.bf16.msra.mxu0 0
        %1045 = vmatpush.bf16.msra.mxu0 0
        %1046 = vmatpush.bf16.msra.mxu0 0
        %1047 = vmatpush.bf16.msra.mxu0 0
        %1048 = vmatpush.bf16.msra.mxu0 0
        %1049 = vmatpush.bf16.msra.mxu0 0
        %1050 = vmatpush.bf16.msra.mxu0 0
        %1051 = vmatpush.bf16.msra.mxu0 %v1042
        %1052 = vmatmul.bf16.gmra.mxu0 %v1039
        %v1053 = vpop.f32.mrf.mxu0
        %v1054 = vadd.f32 0.0, %v1053
        %v1055 = vpop.f32.mrf.mxu0
        %1056 = vdwg.mxu0
        %1058 = vrot.lane.b32.xlu0 %v1054, 32
        %v1059 = vpop.permute.xlu0 %1058
        %vm1061 = vcmask 523520
        %1062 = vst.msk [vmem:[#allocation3] sm:$0xff] %vm1061, %v1059
        %1063 = vrot.lane.b32.xlu0 %v934, 64
        %v1064 = vpop.permute.xlu0 %1063
        %1065 = vrot.lane.b32.xlu0 %v935, 64
        %v1066 = vpop.permute.xlu0 %1065
        %v1068 = vsel %vm610, %v1064, 0
        %v1071 = vsel %vm610, %v1066, 0
        %1073 = vmatpush.bf16.xpose.msra.mxu0 0
        %1074 = vmatpush.bf16.xpose.msra.mxu0 0
        %1075 = vmatpush.bf16.xpose.msra.mxu0 0
        %1076 = vmatpush.bf16.xpose.msra.mxu0 0
        %1077 = vmatpush.bf16.xpose.msra.mxu0 0
        %1078 = vmatpush.bf16.xpose.msra.mxu0 0
        %1079 = vmatpush.bf16.xpose.msra.mxu0 0
        %1080 = vmatpush.bf16.xpose.msra.mxu0 %v1071
        %1081 = vmatmul.bf16.gmra.mxu0 %v1068
        %v1082 = vpop.f32.mrf.mxu0
        %v1083 = vadd.f32 0.0, %v1082
        %v1084 = vpop.f32.mrf.mxu0
        %1085 = vdwg.mxu0
        %v1086 = vmul.f32 %v1083, 0.17677669
        %v1087 = vmul.f32 %v1086, %v931
        %v1088 = vadd.f32 %v1087, %v933
        %v1089 = vsel %vm959, %v1088, -inf
        %1090 = vmax.xlane.f32.xlu0 %v1089
        %v1091 = vpop.xlane.xlu0 %1090
        %v1092 = vsub.f32 %v1088, %v1091
        %v1093 = vmul.f32 %v1092, 1.442695
        %v1094 = vpow.pop %v1093
        %v1095 = vsel %vm959, %v1094, 0.0
        %1096 = vadd.xlane.f32.xlu0 %v1095
        %v1097 = vpop.xlane.xlu0 %1096
        %v1098 = vrcp.pop %v1097
        %v1099 = vmul.f32 %v1094, %v1098
        %v1100 = vmul.f32 %v1099, %v931
        %v1101 = vpack.c.bf16 %v1100, %v1100
        %1102 = vrot.lane.b32.xlu0 %v936, 64
        %v1103 = vpop.permute.xlu0 %1102
        %v1105 = vsel %vm959, %v1101, 0
        %v1108 = vsel %vm976, %v1103, 0
        %1110 = vmatpush.bf16.msra.mxu0 0
        %1111 = vmatpush.bf16.msra.mxu0 0
        %1112 = vmatpush.bf16.msra.mxu0 0
        %1113 = vmatpush.bf16.msra.mxu0 0
        %1114 = vmatpush.bf16.msra.mxu0 0
        %1115 = vmatpush.bf16.msra.mxu0 0
        %1116 = vmatpush.bf16.msra.mxu0 0
        %1117 = vmatpush.bf16.msra.mxu0 %v1108
        %1118 = vmatmul.bf16.gmra.mxu0 %v1105
        %v1119 = vpop.f32.mrf.mxu0
        %v1120 = vadd.f32 0.0, %v1119
        %v1121 = vpop.f32.mrf.mxu0
        %1122 = vdwg.mxu0
        %1124 = vrot.lane.b32.xlu0 %v1120, 64
        %v1125 = vpop.permute.xlu0 %1124
        %vm1127 = vcmask 785920
        %1128 = vst.msk [vmem:[#allocation3] sm:$0xff] %vm1127, %v1125
        %1129 = vrot.lane.b32.xlu0 %v934, 32
        %v1130 = vpop.permute.xlu0 %1129
        %1131 = vrot.lane.b32.xlu0 %v935, 32
        %v1132 = vpop.permute.xlu0 %1131
        %v1134 = vsel %vm610, %v1130, 0
        %v1137 = vsel %vm610, %v1132, 0
        %1139 = vmatpush.bf16.xpose.msra.mxu0 0
        %1140 = vmatpush.bf16.xpose.msra.mxu0 0
        %1141 = vmatpush.bf16.xpose.msra.mxu0 0
        %1142 = vmatpush.bf16.xpose.msra.mxu0 0
        %1143 = vmatpush.bf16.xpose.msra.mxu0 0
        %1144 = vmatpush.bf16.xpose.msra.mxu0 0
        %1145 = vmatpush.bf16.xpose.msra.mxu0 0
        %1146 = vmatpush.bf16.xpose.msra.mxu0 %v1137
        %1147 = vmatmul.bf16.gmra.mxu0 %v1134
        %v1148 = vpop.f32.mrf.mxu0
        %v1149 = vadd.f32 0.0, %v1148
        %v1150 = vpop.f32.mrf.mxu0
        %1151 = vdwg.mxu0
        %v1152 = vmul.f32 %v1149, 0.17677669
        %v1153 = vmul.f32 %v1152, %v931
        %v1154 = vadd.f32 %v1153, %v933
        %v1155 = vsel %vm959, %v1154, -inf
        %1156 = vmax.xlane.f32.xlu0 %v1155
        %v1157 = vpop.xlane.xlu0 %1156
        %v1158 = vsub.f32 %v1154, %v1157
        %v1159 = vmul.f32 %v1158, 1.442695
        %v1160 = vpow.pop %v1159
        %v1161 = vsel %vm959, %v1160, 0.0
        %1162 = vadd.xlane.f32.xlu0 %v1161
        %v1163 = vpop.xlane.xlu0 %1162
        %v1164 = vrcp.pop %v1163
        %v1165 = vmul.f32 %v1160, %v1164
        %v1166 = vmul.f32 %v1165, %v931
        %v1167 = vpack.c.bf16 %v1166, %v1166
        %1168 = vrot.lane.b32.xlu0 %v936, 32
        %v1169 = vpop.permute.xlu0 %1168
        %v1171 = vsel %vm959, %v1167, 0
        %v1174 = vsel %vm976, %v1169, 0
        %1176 = vmatpush.bf16.msra.mxu0 0
        %1177 = vmatpush.bf16.msra.mxu0 0
        %1178 = vmatpush.bf16.msra.mxu0 0
        %1179 = vmatpush.bf16.msra.mxu0 0
        %1180 = vmatpush.bf16.msra.mxu0 0
        %1181 = vmatpush.bf16.msra.mxu0 0
        %1182 = vmatpush.bf16.msra.mxu0 0
        %1183 = vmatpush.bf16.msra.mxu0 %v1174
        %1184 = vmatmul.bf16.gmra.mxu0 %v1171
        %v1185 = vpop.f32.mrf.mxu0
        %v1186 = vadd.f32 0.0, %v1185
        %v1187 = vpop.f32.mrf.mxu0
        %1188 = vdwg.mxu0
        %1190 = vrot.lane.b32.xlu0 %v1186, 96
        %v1191 = vpop.permute.xlu0 %1190
        %vm1193 = vcmask 1048320
        %1194 = vst.msk [vmem:[#allocation3] sm:$0xff] %vm1193, %v1191
        %v1195 = vpack.c.bf16 %v868, %v868
        %v1196 = vpack.c.bf16 %v894, %v894
        %v1197 = vpack.c.bf16 %v920, %v920
        %v1199 = vsel %vm610, %v1195, 0
        %v1202 = vsel %vm610, %v1196, 0
        %1204 = vmatpush.bf16.xpose.msra.mxu0 0
        %1205 = vmatpush.bf16.xpose.msra.mxu0 0
        %1206 = vmatpush.bf16.xpose.msra.mxu0 0
        %1207 = vmatpush.bf16.xpose.msra.mxu0 0
        %1208 = vmatpush.bf16.xpose.msra.mxu0 0
        %1209 = vmatpush.bf16.xpose.msra.mxu0 0
        %1210 = vmatpush.bf16.xpose.msra.mxu0 0
        %1211 = vmatpush.bf16.xpose.msra.mxu0 %v1202
        %1212 = vmatmul.bf16.gmra.mxu0 %v1199
        %v1213 = vpop.f32.mrf.mxu0
        %v1214 = vadd.f32 0.0, %v1213
        %v1215 = vpop.f32.mrf.mxu0
        %1216 = vdwg.mxu0
        %v1217 = vmul.f32 %v1214, 0.17677669
        %v1218 = vmul.f32 %v1217, %v931
        %v1219 = vadd.f32 %v1218, %v933
        %v1220 = vsel %vm959, %v1219, -inf
        %1221 = vmax.xlane.f32.xlu0 %v1220
        %v1222 = vpop.xlane.xlu0 %1221
        %v1223 = vsub.f32 %v1219, %v1222
        %v1224 = vmul.f32 %v1223, 1.442695
        %v1225 = vpow.pop %v1224
        %v1226 = vsel %vm959, %v1225, 0.0
        %1227 = vadd.xlane.f32.xlu0 %v1226
        %v1228 = vpop.xlane.xlu0 %1227
        %v1229 = vrcp.pop %v1228
        %v1230 = vmul.f32 %v1225, %v1229
        %v1231 = vmul.f32 %v1230, %v931
        %v1232 = vpack.c.bf16 %v1231, %v1231
        %v1234 = vsel %vm959, %v1232, 0
        %v1237 = vsel %vm976, %v1197, 0
        %1239 = vmatpush.bf16.msra.mxu0 0
        %1240 = vmatpush.bf16.msra.mxu0 0
        %1241 = vmatpush.bf16.msra.mxu0 0
        %1242 = vmatpush.bf16.msra.mxu0 0
        %1243 = vmatpush.bf16.msra.mxu0 0
        %1244 = vmatpush.bf16.msra.mxu0 0
        %1245 = vmatpush.bf16.msra.mxu0 0
        %1246 = vmatpush.bf16.msra.mxu0 %v1237
        %1247 = vmatmul.bf16.gmra.mxu0 %v1234
        %v1248 = vpop.f32.mrf.mxu0
        %v1249 = vadd.f32 0.0, %v1248
        %v1250 = vpop.f32.mrf.mxu0
        %1251 = vdwg.mxu0
        %1252 = vst.msk [vmem:[#allocation3 + $0x8] sm:$0xff] %vm610, %v1249
        %1254 = vrot.lane.b32.xlu0 %v1195, 96
        %v1255 = vpop.permute.xlu0 %1254
        %1257 = vrot.lane.b32.xlu0 %v1196, 96
        %v1258 = vpop.permute.xlu0 %1257
        %v1260 = vsel %vm610, %v1255, 0
        %v1263 = vsel %vm610, %v1258, 0
        %1265 = vmatpush.bf16.xpose.msra.mxu0 0
        %1266 = vmatpush.bf16.xpose.msra.mxu0 0
        %1267 = vmatpush.bf16.xpose.msra.mxu0 0
        %1268 = vmatpush.bf16.xpose.msra.mxu0 0
        %1269 = vmatpush.bf16.xpose.msra.mxu0 0
        %1270 = vmatpush.bf16.xpose.msra.mxu0 0
        %1271 = vmatpush.bf16.xpose.msra.mxu0 0
        %1272 = vmatpush.bf16.xpose.msra.mxu0 %v1263
        %1273 = vmatmul.bf16.gmra.mxu0 %v1260
        %v1274 = vpop.f32.mrf.mxu0
        %v1275 = vadd.f32 0.0, %v1274
        %v1276 = vpop.f32.mrf.mxu0
        %1277 = vdwg.mxu0
        %v1278 = vmul.f32 %v1275, 0.17677669
        %v1279 = vmul.f32 %v1278, %v931
        %v1280 = vadd.f32 %v1279, %v933
        %v1281 = vsel %vm959, %v1280, -inf
        %1282 = vmax.xlane.f32.xlu0 %v1281
        %v1283 = vpop.xlane.xlu0 %1282
        %v1284 = vsub.f32 %v1280, %v1283
        %v1285 = vmul.f32 %v1284, 1.442695
        %v1286 = vpow.pop %v1285
        %v1287 = vsel %vm959, %v1286, 0.0
        %1288 = vadd.xlane.f32.xlu0 %v1287
        %v1289 = vpop.xlane.xlu0 %1288
        %v1290 = vrcp.pop %v1289
        %v1291 = vmul.f32 %v1286, %v1290
        %v1292 = vmul.f32 %v1291, %v931
        %v1293 = vpack.c.bf16 %v1292, %v1292
        %1295 = vrot.lane.b32.xlu0 %v1197, 96
        %v1296 = vpop.permute.xlu0 %1295
        %v1298 = vsel %vm959, %v1293, 0
        %v1301 = vsel %vm976, %v1296, 0
        %1303 = vmatpush.bf16.msra.mxu0 0
        %1304 = vmatpush.bf16.msra.mxu0 0
        %1305 = vmatpush.bf16.msra.mxu0 0
        %1306 = vmatpush.bf16.msra.mxu0 0
        %1307 = vmatpush.bf16.msra.mxu0 0
        %1308 = vmatpush.bf16.msra.mxu0 0
        %1309 = vmatpush.bf16.msra.mxu0 0
        %1310 = vmatpush.bf16.msra.mxu0 %v1301
        %1311 = vmatmul.bf16.gmra.mxu0 %v1298
        %v1312 = vpop.f32.mrf.mxu0
        %v1313 = vadd.f32 0.0, %v1312
        %v1314 = vpop.f32.mrf.mxu0
        %1315 = vdwg.mxu0
        %1317 = vrot.lane.b32.xlu0 %v1313, 32
        %v1318 = vpop.permute.xlu0 %1317
        %1320 = vst.msk [vmem:[#allocation3 + $0x8] sm:$0xff] %vm1061, %v1318
        %1321 = vrot.lane.b32.xlu0 %v1195, 64
        %v1322 = vpop.permute.xlu0 %1321
        %1323 = vrot.lane.b32.xlu0 %v1196, 64
        %v1324 = vpop.permute.xlu0 %1323
        %v1326 = vsel %vm610, %v1322, 0
        %v1329 = vsel %vm610, %v1324, 0
        %1331 = vmatpush.bf16.xpose.msra.mxu0 0
        %1332 = vmatpush.bf16.xpose.msra.mxu0 0
        %1333 = vmatpush.bf16.xpose.msra.mxu0 0
        %1334 = vmatpush.bf16.xpose.msra.mxu0 0
        %1335 = vmatpush.bf16.xpose.msra.mxu0 0
        %1336 = vmatpush.bf16.xpose.msra.mxu0 0
        %1337 = vmatpush.bf16.xpose.msra.mxu0 0
        %1338 = vmatpush.bf16.xpose.msra.mxu0 %v1329
        %1339 = vmatmul.bf16.gmra.mxu0 %v1326
        %v1340 = vpop.f32.mrf.mxu0
        %v1341 = vadd.f32 0.0, %v1340
        %v1342 = vpop.f32.mrf.mxu0
        %1343 = vdwg.mxu0
        %v1344 = vmul.f32 %v1341, 0.17677669
        %v1345 = vmul.f32 %v1344, %v931
        %v1346 = vadd.f32 %v1345, %v933
        %v1347 = vsel %vm959, %v1346, -inf
        %1348 = vmax.xlane.f32.xlu0 %v1347
        %v1349 = vpop.xlane.xlu0 %1348
        %v1350 = vsub.f32 %v1346, %v1349
        %v1351 = vmul.f32 %v1350, 1.442695
        %v1352 = vpow.pop %v1351
        %v1353 = vsel %vm959, %v1352, 0.0
        %1354 = vadd.xlane.f32.xlu0 %v1353
        %v1355 = vpop.xlane.xlu0 %1354
        %v1356 = vrcp.pop %v1355
        %v1357 = vmul.f32 %v1352, %v1356
        %v1358 = vmul.f32 %v1357, %v931
        %v1359 = vpack.c.bf16 %v1358, %v1358
        %1360 = vrot.lane.b32.xlu0 %v1197, 64
        %v1361 = vpop.permute.xlu0 %1360
        %v1363 = vsel %vm959, %v1359, 0
        %v1366 = vsel %vm976, %v1361, 0
        %1368 = vmatpush.bf16.msra.mxu0 0
        %1369 = vmatpush.bf16.msra.mxu0 0
        %1370 = vmatpush.bf16.msra.mxu0 0
        %1371 = vmatpush.bf16.msra.mxu0 0
        %1372 = vmatpush.bf16.msra.mxu0 0
        %1373 = vmatpush.bf16.msra.mxu0 0
        %1374 = vmatpush.bf16.msra.mxu0 0
        %1375 = vmatpush.bf16.msra.mxu0 %v1366
        %1376 = vmatmul.bf16.gmra.mxu0 %v1363
        %v1377 = vpop.f32.mrf.mxu0
        %v1378 = vadd.f32 0.0, %v1377
        %v1379 = vpop.f32.mrf.mxu0
        %1380 = vdwg.mxu0
        %1382 = vrot.lane.b32.xlu0 %v1378, 64
        %v1383 = vpop.permute.xlu0 %1382
        %1385 = vst.msk [vmem:[#allocation3 + $0x8] sm:$0xff] %vm1127, %v1383
        %1386 = vrot.lane.b32.xlu0 %v1195, 32
        %v1387 = vpop.permute.xlu0 %1386
        %1388 = vrot.lane.b32.xlu0 %v1196, 32
        %v1389 = vpop.permute.xlu0 %1388
        %v1391 = vsel %vm610, %v1387, 0
        %v1394 = vsel %vm610, %v1389, 0
        %1396 = vmatpush.bf16.xpose.msra.mxu0 0
        %1397 = vmatpush.bf16.xpose.msra.mxu0 0
        %1398 = vmatpush.bf16.xpose.msra.mxu0 0
        %1399 = vmatpush.bf16.xpose.msra.mxu0 0
        %1400 = vmatpush.bf16.xpose.msra.mxu0 0
        %1401 = vmatpush.bf16.xpose.msra.mxu0 0
        %1402 = vmatpush.bf16.xpose.msra.mxu0 0
        %1403 = vmatpush.bf16.xpose.msra.mxu0 %v1394
        %1404 = vmatmul.bf16.gmra.mxu0 %v1391
        %v1405 = vpop.f32.mrf.mxu0
        %v1406 = vadd.f32 0.0, %v1405
        %v1407 = vpop.f32.mrf.mxu0
        %1408 = vdwg.mxu0
        %v1409 = vmul.f32 %v1406, 0.17677669
        %v1410 = vmul.f32 %v1409, %v931
        %v1411 = vadd.f32 %v1410, %v933
        %v1412 = vsel %vm959, %v1411, -inf
        %1413 = vmax.xlane.f32.xlu0 %v1412
        %v1414 = vpop.xlane.xlu0 %1413
        %v1415 = vsub.f32 %v1411, %v1414
        %v1416 = vmul.f32 %v1415, 1.442695
        %v1417 = vpow.pop %v1416
        %v1418 = vsel %vm959, %v1417, 0.0
        %1419 = vadd.xlane.f32.xlu0 %v1418
        %v1420 = vpop.xlane.xlu0 %1419
        %v1421 = vrcp.pop %v1420
        %v1422 = vmul.f32 %v1417, %v1421
        %v1423 = vmul.f32 %v1422, %v931
        %v1424 = vpack.c.bf16 %v1423, %v1423
        %1425 = vrot.lane.b32.xlu0 %v1197, 32
        %v1426 = vpop.permute.xlu0 %1425
        %v1428 = vsel %vm959, %v1424, 0
        %v1431 = vsel %vm976, %v1426, 0
        %1433 = vmatpush.bf16.msra.mxu0 0
        %1434 = vmatpush.bf16.msra.mxu0 0
        %1435 = vmatpush.bf16.msra.mxu0 0
        %1436 = vmatpush.bf16.msra.mxu0 0
        %1437 = vmatpush.bf16.msra.mxu0 0
        %1438 = vmatpush.bf16.msra.mxu0 0
        %1439 = vmatpush.bf16.msra.mxu0 0
        %1440 = vmatpush.bf16.msra.mxu0 %v1431
        %1441 = vmatmul.bf16.gmra.mxu0 %v1428
        %v1442 = vpop.f32.mrf.mxu0
        %v1443 = vadd.f32 0.0, %v1442
        %v1444 = vpop.f32.mrf.mxu0
        %1445 = vdwg.mxu0
        %1447 = vrot.lane.b32.xlu0 %v1443, 96
        %v1448 = vpop.permute.xlu0 %1447
        %1450 = vst.msk [vmem:[#allocation3 + $0x8] sm:$0xff] %vm1193, %v1448
        %v1451 = vld [vmem:[#allocation3] sm:$0xff]
        %v1452 = vld [vmem:[#allocation3 + $0x8] sm:$0xff]
        %v1453 = vpack.c.bf16 %v1451, %v1451
        %v1454 = vpack.c.bf16 %v1452, %v1452
        %v1455 = vld [vmem:[%s12] sm:$0xf]
        %v1456 = vld [vmem:[%s12 + $0x4] sm:$0xf]
        %v1457 = vld [vmem:[%s12 + $0x8] sm:$0xf]
        %v1458 = vld [vmem:[%s12 + $0xc] sm:$0xf]
        %v1459 = vld [vmem:[%s12 + $0x10] sm:$0xf]
        %v1460 = vld [vmem:[%s12 + $0x14] sm:$0xf]
        %v1461 = vld [vmem:[%s12 + $0x18] sm:$0xf]
        %v1462 = vld [vmem:[%s12 + $0x1c] sm:$0xf]
        %v1463 = vld [vmem:[%s12 + $0x20] sm:$0xf]
        %v1464 = vld [vmem:[%s12 + $0x24] sm:$0xf]
        %v1465 = vld [vmem:[%s12 + $0x28] sm:$0xf]
        %v1466 = vld [vmem:[%s12 + $0x2c] sm:$0xf]
        %v1467 = vld [vmem:[%s12 + $0x30] sm:$0xf]
        %v1468 = vld [vmem:[%s12 + $0x34] sm:$0xf]
        %v1469 = vld [vmem:[%s12 + $0x38] sm:$0xf]
        %v1470 = vld [vmem:[%s12 + $0x3c] sm:$0xf]
        %v1471 = vld [vmem:[%s12 + $0x40] sm:$0xf]
        %v1472 = vld [vmem:[%s12 + $0x44] sm:$0xf]
        %v1473 = vld [vmem:[%s12 + $0x48] sm:$0xf]
        %v1474 = vld [vmem:[%s12 + $0x4c] sm:$0xf]
        %v1475 = vld [vmem:[%s12 + $0x50] sm:$0xf]
        %v1476 = vld [vmem:[%s12 + $0x54] sm:$0xf]
        %v1477 = vld [vmem:[%s12 + $0x58] sm:$0xf]
        %v1478 = vld [vmem:[%s12 + $0x5c] sm:$0xf]
        %v1479 = vld [vmem:[%s12 + $0x60] sm:$0xf]
        %v1480 = vld [vmem:[%s12 + $0x64] sm:$0xf]
        %v1481 = vld [vmem:[%s12 + $0x68] sm:$0xf]
        %v1482 = vld [vmem:[%s12 + $0x6c] sm:$0xf]
        %v1483 = vld [vmem:[%s12 + $0x70] sm:$0xf]
        %v1484 = vld [vmem:[%s12 + $0x74] sm:$0xf]
        %v1485 = vld [vmem:[%s12 + $0x78] sm:$0xf]
        %v1486 = vld [vmem:[%s12 + $0x7c] sm:$0xf]
        %v1487 = vld [vmem:[%s13] sm:$0x1]
        %v1489 = vperm.slane %v1487, 0
        %v1523 = vunpack.c.l.b16 %v1455
        %v1524 = vunpack.c.l.b16 %v1456
        %v1525 = vunpack.c.l.b16 %v1457
        %v1526 = vunpack.c.l.b16 %v1458
        %v1527 = vunpack.c.l.b16 %v1459
        %v1528 = vunpack.c.l.b16 %v1460
        %v1529 = vunpack.c.l.b16 %v1461
        %v1530 = vunpack.c.l.b16 %v1462
        %v1531 = vunpack.c.l.b16 %v1463
        %v1532 = vunpack.c.l.b16 %v1464
        %v1533 = vunpack.c.l.b16 %v1465
        %v1534 = vunpack.c.l.b16 %v1466
        %v1535 = vunpack.c.l.b16 %v1467
        %v1536 = vunpack.c.l.b16 %v1468
        %v1537 = vunpack.c.l.b16 %v1469
        %v1538 = vunpack.c.l.b16 %v1470
        %v1539 = vunpack.c.l.b16 %v1471
        %v1540 = vunpack.c.l.b16 %v1472
        %v1541 = vunpack.c.l.b16 %v1473
        %v1542 = vunpack.c.l.b16 %v1474
        %v1543 = vunpack.c.l.b16 %v1475
        %v1544 = vunpack.c.l.b16 %v1476
        %v1545 = vunpack.c.l.b16 %v1477
        %v1546 = vunpack.c.l.b16 %v1478
        %v1547 = vunpack.c.l.b16 %v1479
        %v1548 = vunpack.c.l.b16 %v1480
        %v1549 = vunpack.c.l.b16 %v1481
        %v1550 = vunpack.c.l.b16 %v1482
        %v1551 = vunpack.c.l.b16 %v1483
        %v1552 = vunpack.c.l.b16 %v1484
        %v1553 = vunpack.c.l.b16 %v1485
        %v1554 = vunpack.c.l.b16 %v1486
        %v1555 = vpack.c.b16 %v1524, %v1523
        %v1556 = vpack.c.b16 %v1526, %v1525
        %v1557 = vpack.c.b16 %v1528, %v1527
        %v1558 = vpack.c.b16 %v1530, %v1529
        %v1559 = vpack.c.b16 %v1532, %v1531
        %v1560 = vpack.c.b16 %v1534, %v1533
        %v1561 = vpack.c.b16 %v1536, %v1535
        %v1562 = vpack.c.b16 %v1538, %v1537
        %v1563 = vpack.c.b16 %v1540, %v1539
        %v1564 = vpack.c.b16 %v1542, %v1541
        %v1565 = vpack.c.b16 %v1544, %v1543
        %v1566 = vpack.c.b16 %v1546, %v1545
        %v1567 = vpack.c.b16 %v1548, %v1547
        %v1568 = vpack.c.b16 %v1550, %v1549
        %v1569 = vpack.c.b16 %v1552, %v1551
        %v1570 = vpack.c.b16 %v1554, %v1553
        %1587 = vmatpush.bf16.msra.mxu0 %v1562
        %1588 = vmatpush.bf16.msra.mxu0 %v1561
        %1589 = vmatpush.bf16.msra.mxu0 %v1560
        %1590 = vmatpush.bf16.msra.mxu0 %v1559
        %1591 = vmatpush.bf16.msra.mxu0 %v1558
        %1592 = vmatpush.bf16.msra.mxu0 %v1557
        %1593 = vmatpush.bf16.msra.mxu0 %v1556
        %1594 = vmatpush.bf16.msra.mxu0 %v1555
        %1595 = vmatmul.bf16.gmra.mxu0 %v1453
        %v1596 = vpop.f32.mrf.mxu0
        %v1597 = vadd.f32 %v1489, %v1596
        %v1598 = vpop.f32.mrf.mxu0
        %1599 = vdwg.mxu0
        %1600 = vmatpush.bf16.msra.mxu0 %v1570
        %1601 = vmatpush.bf16.msra.mxu0 %v1569
        %1602 = vmatpush.bf16.msra.mxu0 %v1568
        %1603 = vmatpush.bf16.msra.mxu0 %v1567
        %1604 = vmatpush.bf16.msra.mxu0 %v1566
        %1605 = vmatpush.bf16.msra.mxu0 %v1565
        %1606 = vmatpush.bf16.msra.mxu0 %v1564
        %1607 = vmatpush.bf16.msra.mxu0 %v1563
        %1608 = vmatmul.bf16.gmra.mxu0 %v1454
        %v1609 = vpop.f32.mrf.mxu0
        %v1610 = vadd.f32 %v1597, %v1609
        %v1611 = vpop.f32.mrf.mxu0
        %1612 = vdwg.mxu0
        %v1613 = vadd.f32 %v1610, %v730
        %v1614 = vmul.f32 %v1613, %v926
        %v1615 = vsel %vm610, %v1614, 0.0
        %1616 = vadd.xlane.f32.xlu0 %v1615
        %v1617 = vpop.xlane.xlu0 %1616
        %v1618 = vmul.f32 %v1617, %v620
        %v1619 = vsub.f32 %v1614, %v1618
        %v1620 = vmul.f32 %v1619, %v1619
        %v1621 = vsel %vm610, %v1620, 0.0
        %1622 = vadd.xlane.f32.xlu0 %v1621
        %v1623 = vpop.xlane.xlu0 %1622
        %v1624 = vmul.f32 %v1623, %v620
        %v1625 = vadd.f32 %v1624, 1e-05
        %v1626 = vrsqrt.pop %v1625
        %v1627 = vmul.f32 %v1626, %v1625
        %v1628 = vmul.f32 %v1627, %v1626
        %v1629 = vmul.f32 0.5, %v1628
        %v1630 = vsub.f32 1.5, %v1629
        %v1631 = vmul.f32 %v1626, %v1630
        %vm1632 = vweird.f32 %v1625
        %vm1633 = vweird.f32 %v1626
        %vm1634 = vmor %vm1632, %vm1633
        %v1635 = vsel %vm1634, %v1626, %v1631
        %v1636 = vmul.f32 %v1619, %v1635
        %v1637 = vmul.f32 %v1636, %v641
        %v1638 = vadd.f32 %v1637, %v645
        %v1639 = vpack.c.bf16 %v1638, %v1638
        %v1640 = vld [vmem:[%s14] sm:$0xf]
        %v1641 = vld [vmem:[%s14 + $0x4] sm:$0xf]
        %v1642 = vld [vmem:[%s14 + $0x8] sm:$0xf]
        %v1643 = vld [vmem:[%s14 + $0xc] sm:$0xf]
        %v1644 = vld [vmem:[%s15] sm:$0x1]
        %v1646 = vperm.slane %v1644, 0
        %v1652 = vunpack.c.l.b16 %v1640
        %v1653 = vunpack.c.l.b16 %v1641
        %v1654 = vunpack.c.l.b16 %v1642
        %v1655 = vunpack.c.l.b16 %v1643
        %v1656 = vpack.c.b16 %v1653, %v1652
        %v1657 = vpack.c.b16 %v1655, %v1654
        %v1661 = vsel %vm610, %v1639, 0
        %1663 = vmatpush.bf16.msra.mxu0 0
        %1664 = vmatpush.bf16.msra.mxu0 0
        %1665 = vmatpush.bf16.msra.mxu0 0
        %1666 = vmatpush.bf16.msra.mxu0 0
        %1667 = vmatpush.bf16.msra.mxu0 0
        %1668 = vmatpush.bf16.msra.mxu0 0
        %1669 = vmatpush.bf16.msra.mxu0 %v1657
        %1670 = vmatpush.bf16.msra.mxu0 %v1656
        %1671 = vmatmul.bf16.gmra.mxu0 %v1661
        %v1672 = vpop.f32.mrf.mxu0
        %v1673 = vadd.f32 %v1646, %v1672
        %v1674 = vpop.f32.mrf.mxu0
        %1675 = vdwg.mxu0
        %v1676 = vmax.f32 %v1673, 0.0
        %v1677 = vpack.c.bf16 %v1676, %v1676
        %v1678 = vld [vmem:[%s16] sm:$0xf]
        %v1679 = vld [vmem:[%s16 + $0x4] sm:$0xf]
        %v1680 = vld [vmem:[%s16 + $0x8] sm:$0xf]
        %v1681 = vld [vmem:[%s16 + $0xc] sm:$0xf]
        %v1682 = vld [vmem:[%s16 + $0x10] sm:$0xf]
        %v1683 = vld [vmem:[%s16 + $0x14] sm:$0xf]
        %v1684 = vld [vmem:[%s16 + $0x18] sm:$0xf]
        %v1685 = vld [vmem:[%s16 + $0x1c] sm:$0xf]
        %v1686 = vld [vmem:[%s16 + $0x20] sm:$0xf]
        %v1687 = vld [vmem:[%s16 + $0x24] sm:$0xf]
        %v1688 = vld [vmem:[%s16 + $0x28] sm:$0xf]
        %v1689 = vld [vmem:[%s16 + $0x2c] sm:$0xf]
        %v1690 = vld [vmem:[%s16 + $0x30] sm:$0xf]
        %v1691 = vld [vmem:[%s16 + $0x34] sm:$0xf]
        %v1692 = vld [vmem:[%s16 + $0x38] sm:$0xf]
        %v1693 = vld [vmem:[%s16 + $0x3c] sm:$0xf]
        %v1694 = vld [vmem:[%s17] sm:$0x1]
        %v1696 = vperm.slane %v1694, 0
        %v1714 = vunpack.c.l.b16 %v1678
        %v1715 = vunpack.c.l.b16 %v1679
        %v1716 = vunpack.c.l.b16 %v1680
        %v1717 = vunpack.c.l.b16 %v1681
        %v1718 = vunpack.c.l.b16 %v1682
        %v1719 = vunpack.c.l.b16 %v1683
        %v1720 = vunpack.c.l.b16 %v1684
        %v1721 = vunpack.c.l.b16 %v1685
        %v1722 = vunpack.c.l.b16 %v1686
        %v1723 = vunpack.c.l.b16 %v1687
        %v1724 = vunpack.c.l.b16 %v1688
        %v1725 = vunpack.c.l.b16 %v1689
        %v1726 = vunpack.c.l.b16 %v1690
        %v1727 = vunpack.c.l.b16 %v1691
        %v1728 = vunpack.c.l.b16 %v1692
        %v1729 = vunpack.c.l.b16 %v1693
        %v1730 = vpack.c.b16 %v1715, %v1714
        %v1731 = vpack.c.b16 %v1717, %v1716
        %v1732 = vpack.c.b16 %v1719, %v1718
        %v1733 = vpack.c.b16 %v1721, %v1720
        %v1734 = vpack.c.b16 %v1723, %v1722
        %v1735 = vpack.c.b16 %v1725, %v1724
        %v1736 = vpack.c.b16 %v1727, %v1726
        %v1737 = vpack.c.b16 %v1729, %v1728
        %1746 = vmatpush.bf16.msra.mxu0 %v1737
        %1747 = vmatpush.bf16.msra.mxu0 %v1736
        %1748 = vmatpush.bf16.msra.mxu0 %v1735
        %1749 = vmatpush.bf16.msra.mxu0 %v1734
        %1750 = vmatpush.bf16.msra.mxu0 %v1733
        %1751 = vmatpush.bf16.msra.mxu0 %v1732
        %1752 = vmatpush.bf16.msra.mxu0 %v1731
        %1753 = vmatpush.bf16.msra.mxu0 %v1730
        %1754 = vmatmul.bf16.gmra.mxu0 %v1677
        %v1755 = vpop.f32.mrf.mxu0
        %v1756 = vadd.f32 %v1696, %v1755
        %v1757 = vpop.f32.mrf.mxu0
        %1758 = vdwg.mxu0
        %v1759 = vadd.f32 %v1756, %v1614
        %v1760 = vmul.f32 %v1759, %v926
        %1761 = vst.msk [vmem:[%s590] sm:$0xff] %vm610, %v1760
        %s1762 = sand.u32 %s433, 1
        %s1763 = scalar_lea.sflag [#allocation5], %s1762
        %s1764 = sand.u32 %s433, 1
        %s1765 = smul.addr %s1764, 8
        %s1766 = scalar_lea.vmem [#allocation4], %s1765
        // Predicated region
        $region93: #{tpu_custom_call.1} parent=91 // pred_check
          %p1767 = pneg %p443
        $region94: #{tpu_custom_call.1} parent=91 // pred_check_branch
          %1769 = sbr.rel (%p1767) target = $region96
        $region95: #{tpu_custom_call.1} parent=91 // pred_region
          %1771 = vsyncadd %s1763, 0
          %s1772 = smul.addr %s32, 8
          %s1773 = scalar_lea.hbm %s18, %s1772
          %s1775 = sshll.u32 %s1766, 4
          %s1776 = int_to_ptr.vmem [resolvable:$true] %s1775
          %s1777 = sshll.u32 %s1773, 4
          %s1778 = int_to_ptr.hbm [resolvable:$true] %s1777
          %1780 = dma.vmem_to_hbm [thread:$0]  %s1776, 128, %s1778, %s1763
        $region96: #{tpu_custom_call.1} parent=91 // pred_fallthru
          _
      $region92: #{tpu_custom_call.1} parent=5 // pred_fallthru
        _
      %p1781 = scmp.le.s32.totalorder 2, %s27
      // Predicated region
      $region97: #{tpu_custom_call.1} parent=5 // pred_check
        %p1782 = pneg %p1781
      $region98: #{tpu_custom_call.1} parent=5 // pred_check_branch
        %1784 = sbr.rel (%p1782) target = $region100
      $region99: #{tpu_custom_call.1} parent=5 // pred_region
        %s1785 = ssub.s32 %s27, 2
        // Predicated region
        $region101: #{tpu_custom_call.1} parent=99 // pred_check
          %p1786 = pneg %p449
        $region102: #{tpu_custom_call.1} parent=99 // pred_check_branch
          %1788 = sbr.rel (%p1786) target = $region104
        $region103: #{tpu_custom_call.1} parent=99 // pred_region
          %s1789 = sand.u32 %s434, 1
          %s1790 = scalar_lea.sflag [#allocation5], %s1789
          %s1791 = sand.u32 %s434, 1
          %s1792 = smul.addr %s1791, 8
          %s1793 = scalar_lea.vmem [#allocation4], %s1792
          %1795 = dma.done %s1790, 128
        $region104: #{tpu_custom_call.1} parent=99 // pred_fallthru
          _
      $region100: #{tpu_custom_call.1} parent=5 // pred_fallthru
        _
    $region6: #{tpu_custom_call.1} parent=1 // loop_footer
      %s31 = sadd.s32 1, %s27
    $region7: #{tpu_custom_call.1} parent=1 // loop_footer_branch
      %26 = sbr.rel target = $region3
    $region8: #{tpu_custom_call.1} parent=1 // loop_exit
      _
    %1796 = vsyncpa [#allocation5], 1
    %s1797 = scalar_lea.sflag [#allocation5], 1
    %1798 = vsyncpa %s1797, 1

</llo_original>
